<compile_context>
chip_gen: v7x
topology: tpu7x:2x2x1
jax: 0.10.0
libtpu: 0.0.40
codegen_flags: <defaults>
</compile_context>

<pallas_src>
import math

import jax
import jax.numpy as jnp
from jax.experimental import pallas as pl
from jax.experimental.pallas import tpu as pltpu


def _round_up(x, m):
    return ((x + m - 1) // m) * m


def _fold_align_and_pad(w_causal, b_causal, w_align, b_align, Kt, c_in, c_out, c_out_p):
    """Fold the Align path into tap Kt-1 of the causal conv and pad each output channel
    half to c_out_p rows (multiple of 8) so the GLU split is sublane-tile aligned.
    Padded rows carry zero weights/bias and are never written to HBM."""
    w = jnp.asarray(w_causal, jnp.float32)                 # (Kt, 2*c_out, c_in)
    b = jnp.asarray(b_causal, jnp.float32).reshape(2 * c_out)
    if c_in > c_out:
        add_w = jnp.asarray(w_align, jnp.float32).reshape(c_out, c_in)
        add_b = jnp.asarray(b_align, jnp.float32).reshape(c_out)
    else:
        # identity (c_in == c_out) or zero-padded identity (c_in < c_out)
        add_w = jnp.eye(c_out, c_in, dtype=jnp.float32)
        add_b = jnp.zeros((c_out,), jnp.float32)
    w = w.at[Kt - 1, :c_out, :].add(add_w)
    b = b.at[:c_out].add(add_b)

    c2p = 2 * c_out_p
    wp = jnp.zeros((Kt, c2p, c_in), jnp.float32)
    wp = wp.at[:, :c_out, :].set(w[:, :c_out, :])
    wp = wp.at[:, c_out_p:c_out_p + c_out, :].set(w[:, c_out:, :])
    bp = jnp.zeros((c2p,), jnp.float32)
    bp = bp.at[:c_out].set(b[:c_out])
    bp = bp.at[c_out_p:c_out_p + c_out].set(b[c_out:])
    return wp, bp


def _make_kernel(Kt, T_out, c_out, c_out_p):
    def kernel(x_ref, w_ref, b_ref, o_ref):
        # x_ref: (c_in, T, V)   w_ref: (Kt, 2*c_out_p, c_in)   b_ref: (2*c_out_p, 1) f32
        # o_ref: (c_out, T_out, V)
        bias = b_ref[...]                        # (2*c_out_p, 1); lane-broadcasts on use
        for t in range(T_out):                   # static & small in STGCN (T ~ 12)
            acc = bias                           # per-time-step f32 accumulator (vregs)
            for k in range(Kt):
                # (2*c_out_p, c_in) @ (c_in, V) on the MXU, f32 accumulation.
                acc = acc + jnp.dot(w_ref[k], x_ref[:, t + k, :],
                                    preferred_element_type=jnp.float32)
            x_p = acc[:c_out]                            # conv p-half + folded Align
            x_q = acc[c_out_p:c_out_p + c_out]           # gate half
            o_ref[:, t, :] = (x_p * jax.nn.sigmoid(x_q)).astype(o_ref.dtype)
    return kernel


def temporal_conv_layer(x, w_causal, b_causal, w_align=None, b_align=None, *,
                        Kt, c_in, c_out, out_dtype=None):
    """STGCN TemporalConvLayer forward.

    x:        [B, c_in, T, V]   (pass it already in the desired compute dtype, e.g. bf16;
                                 the wrapper adds no cast / pad / slice HBM passes)
    w_causal: [Kt, 2*c_out, c_in]   (CausalConv2d weight for kernel (Kt, 1))
    b_causal: [2*c_out]
    w_align:  [c_out, c_in], b_align: [c_out]   (used only when c_in > c_out)
    returns:  [B, c_out, T - Kt + 1, V] in out_dtype (default: x.dtype)
    """
    B, C, T, V = x.shape
    assert C == c_in
    T_out = T - Kt + 1
    assert T_out >= 1
    compute_dtype = x.dtype
    out_dtype = out_dtype or compute_dtype

    c_out_p = _round_up(c_out, 8)       # f32-accumulator sublane tile (gating stays f32)
    c2p = 2 * c_out_p
    w, b = _fold_align_and_pad(w_causal, b_causal, w_align, b_align,
                               Kt, c_in, c_out, c_out_p)
    w = w.astype(compute_dtype)         # MXU inputs in the storage dtype
    b = b.reshape(c2p, 1)               # bias stays f32 (accumulator init)

    # Generation-aware VMEM budget: estimate the per-step footprint from the real block
    # shapes (double-buffered x/out blocks + resident weights/bias, with (sublane, lane)
    # layout padding) and cap at 3/4 of this chip's VMEM capacity.
    bx = jnp.dtype(compute_dtype).itemsize
    bo = jnp.dtype(out_dtype).itemsize
    Vp = _round_up(V, 128)
    vmem_need = (2 * c_in * _round_up(T, 8) * Vp * bx
                 + 2 * c_out * _round_up(T_out, 8) * Vp * bo
                 + 2 * Kt * c2p * _round_up(c_in, 128) * bx
                 + 2 * c2p * 128 * 4)
    try:
        vmem_cap = int(pltpu.get_tpu_info().vmem_capacity_bytes)
    except Exception:  # defensive: fall back to the smallest current-gen VMEM (v7x, 64 MiB)
        vmem_cap = 64 * 1024 * 1024
    vmem_limit = int(min(max(2 * vmem_need, 16 * 1024 * 1024), (vmem_cap * 3) // 4))

    # One batch element per grid step: B "parallel" steps feed both TensorCores on v7x
    # and give the auto-pipeliner steps to overlap DMA with compute; blocks are already
    # in the ~0.1-1 MiB sweet spot for typical STGCN shapes (c_in<=64, T~12, V~200-350).
    # (For tiny B a second grid axis over halo'd time tiles would add steps; not needed
    # at STGCN batch sizes.)
    kernel = _make_kernel(Kt, T_out, c_out, c_out_p)
    out = pl.pallas_call(
        kernel,
        out_shape=jax.ShapeDtypeStruct((B, c_out, T_out, V), out_dtype),
        grid_spec=pltpu.PrefetchScalarGridSpec(
            num_scalar_prefetch=0,
            grid=(B,),
            in_specs=[
                # Last two block dims equal the full array dims -> no HBM padding and no
                # wrapper-side jnp.pad / reshape passes.
                pl.BlockSpec((None, c_in, T, V), lambda bi: (bi, 0, 0, 0)),
                pl.BlockSpec((Kt, c2p, c_in), lambda bi: (0, 0, 0)),     # resident
                pl.BlockSpec((c2p, 1), lambda bi: (0, 0)),               # resident
            ],
            out_specs=pl.BlockSpec((None, c_out, T_out, V), lambda bi: (bi, 0, 0, 0)),
        ),
        compiler_params=pltpu.CompilerParams(
            dimension_semantics=("parallel",),
            vmem_limit_bytes=vmem_limit),
    )(x, w, b)
    return out


def _reference(x, w_causal, b_causal, w_align, b_align, Kt, c_in, c_out):
    """Pure-JAX f32 reference following the PyTorch module exactly (no folding)."""
    B, _, T, V = x.shape
    T_out = T - Kt + 1
    x = x.astype(jnp.float32)
    acc = jnp.zeros((B, 2 * c_out, T_out, V), jnp.float32)
    for k in range(Kt):
        acc = acc + jnp.einsum("oc,bctv->botv",
                               w_causal[k].astype(jnp.float32),
                               x[:, :, k:k + T_out, :])
    acc = acc + b_causal.astype(jnp.float32)[None, :, None, None]
    if c_in > c_out:
        x_in = jnp.einsum("oc,bctv->botv", w_align.astype(jnp.float32),
                          x[:, :, Kt - 1:, :]) \
            + b_align.astype(jnp.float32)[None, :, None, None]
    elif c_in < c_out:
        x_in = jnp.concatenate(
            [x[:, :, Kt - 1:, :],
             jnp.zeros((B, c_out - c_in, T_out, V), jnp.float32)], axis=1)
    else:
        x_in = x[:, :, Kt - 1:, :]
    return (acc[:, :c_out] + x_in) * jax.nn.sigmoid(acc[:, c_out:])


if __name__ == "__main__":
    key = jax.random.PRNGKey(0)

    def run_case(case_key, B, c_in, c_out, T, V, Kt, dtype, rtol):
        k1, k2, k3, k4, k5 = jax.random.split(case_key, 5)
        x = jax.random.normal(k1, (B, c_in, T, V), jnp.float32)
        # CausalConv2d(c_in, 2*c_out, kernel=(Kt, 1)) params.
        w_cc = jax.random.normal(k2, (2 * c_out, c_in, Kt), jnp.float32) / math.sqrt(c_in * Kt)
        b_cc = jax.random.normal(k3, (2 * c_out,), jnp.float32) * 0.1
        w_cc_stacked = jnp.transpose(w_cc, (2, 0, 1))  # (Kt, 2*c_out, c_in)
        w_al = b_al = None
        if c_in > c_out:  # Align 1x1 conv params only used in this branch
            w_al = jax.random.normal(k4, (c_out, c_in), jnp.float32) / math.sqrt(c_in)
            b_al = jax.random.normal(k5, (c_out,), jnp.float32) * 0.1

        xc = x.astype(dtype)   # "producing layer" hands x over already in the compute dtype
        out = temporal_conv_layer(xc, w_cc_stacked, b_cc, w_al, b_al,
                                  Kt=Kt, c_in=c_in, c_out=c_out)
        out = jax.block_until_ready(out)
        ref = _reference(xc.astype(jnp.float32), w_cc_stacked, b_cc, w_al, b_al,
                         Kt, c_in, c_out)
        assert out.shape == (B, c_out, T - Kt + 1, V)
        err = float(jnp.max(jnp.abs(out.astype(jnp.float32) - ref)))
        # Relative-style tolerance: allows for the MXU's reduced-precision f32 pass
        # modes / bf16 rounding while still catching any indexing or fold bug (O(1) err).
        tol = rtol * (1.0 + float(jnp.max(jnp.abs(ref))))
        assert err <= tol, (
            f"max abs err {err} > {tol} "
            f"(B={B} c_in={c_in} c_out={c_out} Kt={Kt} dtype={dtype})")

    keys = jax.random.split(key, 4)
    # Exercise all three Align branches: 1x1-conv (c_in>c_out), zero-pad (c_in<c_out), identity.
    run_case(keys[0], B=2, c_in=6, c_out=4, T=8, V=16, Kt=3, dtype=jnp.float32, rtol=1e-2)
    run_case(keys[1], B=2, c_in=3, c_out=8, T=8, V=16, Kt=3, dtype=jnp.float32, rtol=1e-2)
    run_case(keys[2], B=2, c_in=4, c_out=4, T=8, V=16, Kt=2, dtype=jnp.float32, rtol=1e-2)
    # bf16 storage + bf16 MXU inputs + bf16 output, f32 accumulation/gating.
    run_case(keys[3], B=2, c_in=6, c_out=4, T=8, V=16, Kt=3, dtype=jnp.bfloat16, rtol=5e-2)

    print("KERNEL_OK")
</pallas_src>

<mosaic_0001>
module attributes {stable_mosaic.version = 11 : i64} {
  func.func @kernel(%arg0: i32, %arg1: memref<1x6x8x16xf32, #tpu.memory_space<vmem>>, %arg2: memref<3x16x6xf32, #tpu.memory_space<vmem>>, %arg3: memref<16x1xf32, #tpu.memory_space<vmem>>, %arg4: memref<1x4x6x16xf32, #tpu.memory_space<vmem>>) attributes {dimension_semantics = [#tpu.dimension_semantics<parallel>], iteration_bounds = array<i64: 2>, scalar_prefetch = 0 : i64, scratch_operands = 0 : i64, tpu.core_type = #tpu.core_type<tc>, window_params = [{transform_indices = @transform_0, window_bounds = array<i64: 1, 6, 8, 16>}, {pipeline_mode = #tpu.pipeline_mode<synchronous>, transform_indices = @transform_1, window_bounds = array<i64: 3, 16, 6>}, {pipeline_mode = #tpu.pipeline_mode<synchronous>, transform_indices = @transform_2, window_bounds = array<i64: 16, 1>}, {transform_indices = @transform_3, window_bounds = array<i64: 1, 4, 6, 16>}]} {
    %c0 = arith.constant 0 : index
    %c0_0 = arith.constant 0 : index
    %0 = vector.load %arg3[%c0, %c0_0] : memref<16x1xf32, #tpu.memory_space<vmem>>, vector<16x1xf32>
    %c0_1 = arith.constant 0 : index
    %c0_2 = arith.constant 0 : index
    %c0_3 = arith.constant 0 : index
    %1 = vector.load %arg2[%c0_1, %c0_2, %c0_3] : memref<3x16x6xf32, #tpu.memory_space<vmem>>, vector<1x16x6xf32>
    %2 = vector.shape_cast %1 : vector<1x16x6xf32> to vector<16x6xf32>
    %c0_4 = arith.constant 0 : index
    %c0_5 = arith.constant 0 : index
    %c0_6 = arith.constant 0 : index
    %c0_7 = arith.constant 0 : index
    %3 = vector.load %arg1[%c0_4, %c0_5, %c0_6, %c0_7] : memref<1x6x8x16xf32, #tpu.memory_space<vmem>>, vector<1x6x1x16xf32>
    %4 = vector.shape_cast %3 : vector<1x6x1x16xf32> to vector<6x16xf32>
    %cst = arith.constant dense<0.000000e+00> : vector<16x16xf32>
    %5 = tpu.matmul %2, %4, %cst {dimension_numbers = #tpu.dot_dimension_numbers<[1], [0], [0], [1], [0, 0, 1, 1], [], []>} : vector<16x6xf32>, vector<6x16xf32>, vector<16x16xf32> -> vector<16x16xf32>
    %6 = vector.broadcast %0 : vector<16x1xf32> to vector<16x16xf32>
    %7 = arith.addf %6, %5 : vector<16x16xf32>
    %c1 = arith.constant 1 : index
    %c0_8 = arith.constant 0 : index
    %c0_9 = arith.constant 0 : index
    %8 = vector.load %arg2[%c1, %c0_8, %c0_9] : memref<3x16x6xf32, #tpu.memory_space<vmem>>, vector<1x16x6xf32>
    %9 = vector.shape_cast %8 : vector<1x16x6xf32> to vector<16x6xf32>
    %c0_10 = arith.constant 0 : index
    %c0_11 = arith.constant 0 : index
    %c1_12 = arith.constant 1 : index
    %c0_13 = arith.constant 0 : index
    %10 = vector.load %arg1[%c0_10, %c0_11, %c1_12, %c0_13] : memref<1x6x8x16xf32, #tpu.memory_space<vmem>>, vector<1x6x1x16xf32>
    %11 = vector.shape_cast %10 : vector<1x6x1x16xf32> to vector<6x16xf32>
    %cst_14 = arith.constant dense<0.000000e+00> : vector<16x16xf32>
    %12 = tpu.matmul %9, %11, %cst_14 {dimension_numbers = #tpu.dot_dimension_numbers<[1], [0], [0], [1], [0, 0, 1, 1], [], []>} : vector<16x6xf32>, vector<6x16xf32>, vector<16x16xf32> -> vector<16x16xf32>
    %13 = arith.addf %7, %12 : vector<16x16xf32>
    %c2 = arith.constant 2 : index
    %c0_15 = arith.constant 0 : index
    %c0_16 = arith.constant 0 : index
    %14 = vector.load %arg2[%c2, %c0_15, %c0_16] : memref<3x16x6xf32, #tpu.memory_space<vmem>>, vector<1x16x6xf32>
    %15 = vector.shape_cast %14 : vector<1x16x6xf32> to vector<16x6xf32>
    %c0_17 = arith.constant 0 : index
    %c0_18 = arith.constant 0 : index
    %c2_19 = arith.constant 2 : index
    %c0_20 = arith.constant 0 : index
    %16 = vector.load %arg1[%c0_17, %c0_18, %c2_19, %c0_20] : memref<1x6x8x16xf32, #tpu.memory_space<vmem>>, vector<1x6x1x16xf32>
    %17 = vector.shape_cast %16 : vector<1x6x1x16xf32> to vector<6x16xf32>
    %cst_21 = arith.constant dense<0.000000e+00> : vector<16x16xf32>
    %18 = tpu.matmul %15, %17, %cst_21 {dimension_numbers = #tpu.dot_dimension_numbers<[1], [0], [0], [1], [0, 0, 1, 1], [], []>} : vector<16x6xf32>, vector<6x16xf32>, vector<16x16xf32> -> vector<16x16xf32>
    %19 = arith.addf %13, %18 : vector<16x16xf32>
    %20 = vector.extract_strided_slice %19 {offsets = [0, 0], sizes = [4, 16], strides = [1, 1]} : vector<16x16xf32> to vector<4x16xf32>
    %21 = vector.extract_strided_slice %19 {offsets = [8, 0], sizes = [4, 16], strides = [1, 1]} : vector<16x16xf32> to vector<4x16xf32>
    %22 = arith.negf %21 : vector<4x16xf32>
    %23 = math.exp %22 : vector<4x16xf32>
    %cst_22 = arith.constant 1.000000e+00 : f32
    %24 = vector.broadcast %cst_22 : f32 to vector<4x16xf32>
    %25 = arith.addf %24, %23 : vector<4x16xf32>
    %26 = arith.divf %24, %25 : vector<4x16xf32>
    %27 = arith.mulf %20, %26 : vector<4x16xf32>
    %c0_23 = arith.constant 0 : index
    %c0_24 = arith.constant 0 : index
    %c0_25 = arith.constant 0 : index
    %c0_26 = arith.constant 0 : index
    %28 = vector.load %arg4[%c0_23, %c0_24, %c0_25, %c0_26] : memref<1x4x6x16xf32, #tpu.memory_space<vmem>>, vector<1x4x1x16xf32>
    %29 = vector.shape_cast %28 : vector<1x4x1x16xf32> to vector<4x16xf32>
    %30 = vector.shape_cast %27 : vector<4x16xf32> to vector<1x4x1x16xf32>
    tpu.vector_store %arg4[%c0_23, %c0_24, %c0_25, %c0_26], %30 {strides = array<i32>} : memref<1x4x6x16xf32, #tpu.memory_space<vmem>>, vector<1x4x1x16xf32>,
    %c0_27 = arith.constant 0 : index
    %c0_28 = arith.constant 0 : index
    %c0_29 = arith.constant 0 : index
    %31 = vector.load %arg2[%c0_27, %c0_28, %c0_29] : memref<3x16x6xf32, #tpu.memory_space<vmem>>, vector<1x16x6xf32>
    %32 = vector.shape_cast %31 : vector<1x16x6xf32> to vector<16x6xf32>
    %c0_30 = arith.constant 0 : index
    %c0_31 = arith.constant 0 : index
    %c1_32 = arith.constant 1 : index
    %c0_33 = arith.constant 0 : index
    %33 = vector.load %arg1[%c0_30, %c0_31, %c1_32, %c0_33] : memref<1x6x8x16xf32, #tpu.memory_space<vmem>>, vector<1x6x1x16xf32>
    %34 = vector.shape_cast %33 : vector<1x6x1x16xf32> to vector<6x16xf32>
    %cst_34 = arith.constant dense<0.000000e+00> : vector<16x16xf32>
    %35 = tpu.matmul %32, %34, %cst_34 {dimension_numbers = #tpu.dot_dimension_numbers<[1], [0], [0], [1], [0, 0, 1, 1], [], []>} : vector<16x6xf32>, vector<6x16xf32>, vector<16x16xf32> -> vector<16x16xf32>
    %36 = vector.broadcast %0 : vector<16x1xf32> to vector<16x16xf32>
    %37 = arith.addf %36, %35 : vector<16x16xf32>
    %c1_35 = arith.constant 1 : index
    %c0_36 = arith.constant 0 : index
    %c0_37 = arith.constant 0 : index
    %38 = vector.load %arg2[%c1_35, %c0_36, %c0_37] : memref<3x16x6xf32, #tpu.memory_space<vmem>>, vector<1x16x6xf32>
    %39 = vector.shape_cast %38 : vector<1x16x6xf32> to vector<16x6xf32>
    %c0_38 = arith.constant 0 : index
    %c0_39 = arith.constant 0 : index
    %c2_40 = arith.constant 2 : index
    %c0_41 = arith.constant 0 : index
    %40 = vector.load %arg1[%c0_38, %c0_39, %c2_40, %c0_41] : memref<1x6x8x16xf32, #tpu.memory_space<vmem>>, vector<1x6x1x16xf32>
    %41 = vector.shape_cast %40 : vector<1x6x1x16xf32> to vector<6x16xf32>
    %cst_42 = arith.constant dense<0.000000e+00> : vector<16x16xf32>
    %42 = tpu.matmul %39, %41, %cst_42 {dimension_numbers = #tpu.dot_dimension_numbers<[1], [0], [0], [1], [0, 0, 1, 1], [], []>} : vector<16x6xf32>, vector<6x16xf32>, vector<16x16xf32> -> vector<16x16xf32>
    %43 = arith.addf %37, %42 : vector<16x16xf32>
    %c2_43 = arith.constant 2 : index
    %c0_44 = arith.constant 0 : index
    %c0_45 = arith.constant 0 : index
    %44 = vector.load %arg2[%c2_43, %c0_44, %c0_45] : memref<3x16x6xf32, #tpu.memory_space<vmem>>, vector<1x16x6xf32>
    %45 = vector.shape_cast %44 : vector<1x16x6xf32> to vector<16x6xf32>
    %c0_46 = arith.constant 0 : index
    %c0_47 = arith.constant 0 : index
    %c3 = arith.constant 3 : index
    %c0_48 = arith.constant 0 : index
    %46 = vector.load %arg1[%c0_46, %c0_47, %c3, %c0_48] : memref<1x6x8x16xf32, #tpu.memory_space<vmem>>, vector<1x6x1x16xf32>
    %47 = vector.shape_cast %46 : vector<1x6x1x16xf32> to vector<6x16xf32>
    %cst_49 = arith.constant dense<0.000000e+00> : vector<16x16xf32>
    %48 = tpu.matmul %45, %47, %cst_49 {dimension_numbers = #tpu.dot_dimension_numbers<[1], [0], [0], [1], [0, 0, 1, 1], [], []>} : vector<16x6xf32>, vector<6x16xf32>, vector<16x16xf32> -> vector<16x16xf32>
    %49 = arith.addf %43, %48 : vector<16x16xf32>
    %50 = vector.extract_strided_slice %49 {offsets = [0, 0], sizes = [4, 16], strides = [1, 1]} : vector<16x16xf32> to vector<4x16xf32>
    %51 = vector.extract_strided_slice %49 {offsets = [8, 0], sizes = [4, 16], strides = [1, 1]} : vector<16x16xf32> to vector<4x16xf32>
    %52 = arith.negf %51 : vector<4x16xf32>
    %53 = math.exp %52 : vector<4x16xf32>
    %cst_50 = arith.constant 1.000000e+00 : f32
    %54 = vector.broadcast %cst_50 : f32 to vector<4x16xf32>
    %55 = arith.addf %54, %53 : vector<4x16xf32>
    %56 = arith.divf %54, %55 : vector<4x16xf32>
    %57 = arith.mulf %50, %56 : vector<4x16xf32>
    %c0_51 = arith.constant 0 : index
    %c0_52 = arith.constant 0 : index
    %c1_53 = arith.constant 1 : index
    %c0_54 = arith.constant 0 : index
    %58 = vector.load %arg4[%c0_51, %c0_52, %c1_53, %c0_54] : memref<1x4x6x16xf32, #tpu.memory_space<vmem>>, vector<1x4x1x16xf32>
    %59 = vector.shape_cast %58 : vector<1x4x1x16xf32> to vector<4x16xf32>
    %60 = vector.shape_cast %57 : vector<4x16xf32> to vector<1x4x1x16xf32>
    tpu.vector_store %arg4[%c0_51, %c0_52, %c1_53, %c0_54], %60 {strides = array<i32>} : memref<1x4x6x16xf32, #tpu.memory_space<vmem>>, vector<1x4x1x16xf32>,
    %c0_55 = arith.constant 0 : index
    %c0_56 = arith.constant 0 : index
    %c0_57 = arith.constant 0 : index
    %61 = vector.load %arg2[%c0_55, %c0_56, %c0_57] : memref<3x16x6xf32, #tpu.memory_space<vmem>>, vector<1x16x6xf32>
    %62 = vector.shape_cast %61 : vector<1x16x6xf32> to vector<16x6xf32>
    %c0_58 = arith.constant 0 : index
    %c0_59 = arith.constant 0 : index
    %c2_60 = arith.constant 2 : index
    %c0_61 = arith.constant 0 : index
    %63 = vector.load %arg1[%c0_58, %c0_59, %c2_60, %c0_61] : memref<1x6x8x16xf32, #tpu.memory_space<vmem>>, vector<1x6x1x16xf32>
    %64 = vector.shape_cast %63 : vector<1x6x1x16xf32> to vector<6x16xf32>
    %cst_62 = arith.constant dense<0.000000e+00> : vector<16x16xf32>
    %65 = tpu.matmul %62, %64, %cst_62 {dimension_numbers = #tpu.dot_dimension_numbers<[1], [0], [0], [1], [0, 0, 1, 1], [], []>} : vector<16x6xf32>, vector<6x16xf32>, vector<16x16xf32> -> vector<16x16xf32>
    %66 = vector.broadcast %0 : vector<16x1xf32> to vector<16x16xf32>
    %67 = arith.addf %66, %65 : vector<16x16xf32>
    %c1_63 = arith.constant 1 : index
    %c0_64 = arith.constant 0 : index
    %c0_65 = arith.constant 0 : index
    %68 = vector.load %arg2[%c1_63, %c0_64, %c0_65] : memref<3x16x6xf32, #tpu.memory_space<vmem>>, vector<1x16x6xf32>
    %69 = vector.shape_cast %68 : vector<1x16x6xf32> to vector<16x6xf32>
    %c0_66 = arith.constant 0 : index
    %c0_67 = arith.constant 0 : index
    %c3_68 = arith.constant 3 : index
    %c0_69 = arith.constant 0 : index
    %70 = vector.load %arg1[%c0_66, %c0_67, %c3_68, %c0_69] : memref<1x6x8x16xf32, #tpu.memory_space<vmem>>, vector<1x6x1x16xf32>
    %71 = vector.shape_cast %70 : vector<1x6x1x16xf32> to vector<6x16xf32>
    %cst_70 = arith.constant dense<0.000000e+00> : vector<16x16xf32>
    %72 = tpu.matmul %69, %71, %cst_70 {dimension_numbers = #tpu.dot_dimension_numbers<[1], [0], [0], [1], [0, 0, 1, 1], [], []>} : vector<16x6xf32>, vector<6x16xf32>, vector<16x16xf32> -> vector<16x16xf32>
    %73 = arith.addf %67, %72 : vector<16x16xf32>
    %c2_71 = arith.constant 2 : index
    %c0_72 = arith.constant 0 : index
    %c0_73 = arith.constant 0 : index
    %74 = vector.load %arg2[%c2_71, %c0_72, %c0_73] : memref<3x16x6xf32, #tpu.memory_space<vmem>>, vector<1x16x6xf32>
    %75 = vector.shape_cast %74 : vector<1x16x6xf32> to vector<16x6xf32>
    %c0_74 = arith.constant 0 : index
    %c0_75 = arith.constant 0 : index
    %c4 = arith.constant 4 : index
    %c0_76 = arith.constant 0 : index
    %76 = vector.load %arg1[%c0_74, %c0_75, %c4, %c0_76] : memref<1x6x8x16xf32, #tpu.memory_space<vmem>>, vector<1x6x1x16xf32>
    %77 = vector.shape_cast %76 : vector<1x6x1x16xf32> to vector<6x16xf32>
    %cst_77 = arith.constant dense<0.000000e+00> : vector<16x16xf32>
    %78 = tpu.matmul %75, %77, %cst_77 {dimension_numbers = #tpu.dot_dimension_numbers<[1], [0], [0], [1], [0, 0, 1, 1], [], []>} : vector<16x6xf32>, vector<6x16xf32>, vector<16x16xf32> -> vector<16x16xf32>
    %79 = arith.addf %73, %78 : vector<16x16xf32>
    %80 = vector.extract_strided_slice %79 {offsets = [0, 0], sizes = [4, 16], strides = [1, 1]} : vector<16x16xf32> to vector<4x16xf32>
    %81 = vector.extract_strided_slice %79 {offsets = [8, 0], sizes = [4, 16], strides = [1, 1]} : vector<16x16xf32> to vector<4x16xf32>
    %82 = arith.negf %81 : vector<4x16xf32>
    %83 = math.exp %82 : vector<4x16xf32>
    %cst_78 = arith.constant 1.000000e+00 : f32
    %84 = vector.broadcast %cst_78 : f32 to vector<4x16xf32>
    %85 = arith.addf %84, %83 : vector<4x16xf32>
    %86 = arith.divf %84, %85 : vector<4x16xf32>
    %87 = arith.mulf %80, %86 : vector<4x16xf32>
    %c0_79 = arith.constant 0 : index
    %c0_80 = arith.constant 0 : index
    %c2_81 = arith.constant 2 : index
    %c0_82 = arith.constant 0 : index
    %88 = vector.load %arg4[%c0_79, %c0_80, %c2_81, %c0_82] : memref<1x4x6x16xf32, #tpu.memory_space<vmem>>, vector<1x4x1x16xf32>
    %89 = vector.shape_cast %88 : vector<1x4x1x16xf32> to vector<4x16xf32>
    %90 = vector.shape_cast %87 : vector<4x16xf32> to vector<1x4x1x16xf32>
    tpu.vector_store %arg4[%c0_79, %c0_80, %c2_81, %c0_82], %90 {strides = array<i32>} : memref<1x4x6x16xf32, #tpu.memory_space<vmem>>, vector<1x4x1x16xf32>,
    %c0_83 = arith.constant 0 : index
    %c0_84 = arith.constant 0 : index
    %c0_85 = arith.constant 0 : index
    %91 = vector.load %arg2[%c0_83, %c0_84, %c0_85] : memref<3x16x6xf32, #tpu.memory_space<vmem>>, vector<1x16x6xf32>
    %92 = vector.shape_cast %91 : vector<1x16x6xf32> to vector<16x6xf32>
    %c0_86 = arith.constant 0 : index
    %c0_87 = arith.constant 0 : index
    %c3_88 = arith.constant 3 : index
    %c0_89 = arith.constant 0 : index
    %93 = vector.load %arg1[%c0_86, %c0_87, %c3_88, %c0_89] : memref<1x6x8x16xf32, #tpu.memory_space<vmem>>, vector<1x6x1x16xf32>
    %94 = vector.shape_cast %93 : vector<1x6x1x16xf32> to vector<6x16xf32>
    %cst_90 = arith.constant dense<0.000000e+00> : vector<16x16xf32>
    %95 = tpu.matmul %92, %94, %cst_90 {dimension_numbers = #tpu.dot_dimension_numbers<[1], [0], [0], [1], [0, 0, 1, 1], [], []>} : vector<16x6xf32>, vector<6x16xf32>, vector<16x16xf32> -> vector<16x16xf32>
    %96 = vector.broadcast %0 : vector<16x1xf32> to vector<16x16xf32>
    %97 = arith.addf %96, %95 : vector<16x16xf32>
    %c1_91 = arith.constant 1 : index
    %c0_92 = arith.constant 0 : index
    %c0_93 = arith.constant 0 : index
    %98 = vector.load %arg2[%c1_91, %c0_92, %c0_93] : memref<3x16x6xf32, #tpu.memory_space<vmem>>, vector<1x16x6xf32>
    %99 = vector.shape_cast %98 : vector<1x16x6xf32> to vector<16x6xf32>
    %c0_94 = arith.constant 0 : index
    %c0_95 = arith.constant 0 : index
    %c4_96 = arith.constant 4 : index
    %c0_97 = arith.constant 0 : index
    %100 = vector.load %arg1[%c0_94, %c0_95, %c4_96, %c0_97] : memref<1x6x8x16xf32, #tpu.memory_space<vmem>>, vector<1x6x1x16xf32>
    %101 = vector.shape_cast %100 : vector<1x6x1x16xf32> to vector<6x16xf32>
    %cst_98 = arith.constant dense<0.000000e+00> : vector<16x16xf32>
    %102 = tpu.matmul %99, %101, %cst_98 {dimension_numbers = #tpu.dot_dimension_numbers<[1], [0], [0], [1], [0, 0, 1, 1], [], []>} : vector<16x6xf32>, vector<6x16xf32>, vector<16x16xf32> -> vector<16x16xf32>
    %103 = arith.addf %97, %102 : vector<16x16xf32>
    %c2_99 = arith.constant 2 : index
    %c0_100 = arith.constant 0 : index
    %c0_101 = arith.constant 0 : index
    %104 = vector.load %arg2[%c2_99, %c0_100, %c0_101] : memref<3x16x6xf32, #tpu.memory_space<vmem>>, vector<1x16x6xf32>
    %105 = vector.shape_cast %104 : vector<1x16x6xf32> to vector<16x6xf32>
    %c0_102 = arith.constant 0 : index
    %c0_103 = arith.constant 0 : index
    %c5 = arith.constant 5 : index
    %c0_104 = arith.constant 0 : index
    %106 = vector.load %arg1[%c0_102, %c0_103, %c5, %c0_104] : memref<1x6x8x16xf32, #tpu.memory_space<vmem>>, vector<1x6x1x16xf32>
    %107 = vector.shape_cast %106 : vector<1x6x1x16xf32> to vector<6x16xf32>
    %cst_105 = arith.constant dense<0.000000e+00> : vector<16x16xf32>
    %108 = tpu.matmul %105, %107, %cst_105 {dimension_numbers = #tpu.dot_dimension_numbers<[1], [0], [0], [1], [0, 0, 1, 1], [], []>} : vector<16x6xf32>, vector<6x16xf32>, vector<16x16xf32> -> vector<16x16xf32>
    %109 = arith.addf %103, %108 : vector<16x16xf32>
    %110 = vector.extract_strided_slice %109 {offsets = [0, 0], sizes = [4, 16], strides = [1, 1]} : vector<16x16xf32> to vector<4x16xf32>
    %111 = vector.extract_strided_slice %109 {offsets = [8, 0], sizes = [4, 16], strides = [1, 1]} : vector<16x16xf32> to vector<4x16xf32>
    %112 = arith.negf %111 : vector<4x16xf32>
    %113 = math.exp %112 : vector<4x16xf32>
    %cst_106 = arith.constant 1.000000e+00 : f32
    %114 = vector.broadcast %cst_106 : f32 to vector<4x16xf32>
    %115 = arith.addf %114, %113 : vector<4x16xf32>
    %116 = arith.divf %114, %115 : vector<4x16xf32>
    %117 = arith.mulf %110, %116 : vector<4x16xf32>
    %c0_107 = arith.constant 0 : index
    %c0_108 = arith.constant 0 : index
    %c3_109 = arith.constant 3 : index
    %c0_110 = arith.constant 0 : index
    %118 = vector.load %arg4[%c0_107, %c0_108, %c3_109, %c0_110] : memref<1x4x6x16xf32, #tpu.memory_space<vmem>>, vector<1x4x1x16xf32>
    %119 = vector.shape_cast %118 : vector<1x4x1x16xf32> to vector<4x16xf32>
    %120 = vector.shape_cast %117 : vector<4x16xf32> to vector<1x4x1x16xf32>
    tpu.vector_store %arg4[%c0_107, %c0_108, %c3_109, %c0_110], %120 {strides = array<i32>} : memref<1x4x6x16xf32, #tpu.memory_space<vmem>>, vector<1x4x1x16xf32>,
    %c0_111 = arith.constant 0 : index
    %c0_112 = arith.constant 0 : index
    %c0_113 = arith.constant 0 : index
    %121 = vector.load %arg2[%c0_111, %c0_112, %c0_113] : memref<3x16x6xf32, #tpu.memory_space<vmem>>, vector<1x16x6xf32>
    %122 = vector.shape_cast %121 : vector<1x16x6xf32> to vector<16x6xf32>
    %c0_114 = arith.constant 0 : index
    %c0_115 = arith.constant 0 : index
    %c4_116 = arith.constant 4 : index
    %c0_117 = arith.constant 0 : index
    %123 = vector.load %arg1[%c0_114, %c0_115, %c4_116, %c0_117] : memref<1x6x8x16xf32, #tpu.memory_space<vmem>>, vector<1x6x1x16xf32>
    %124 = vector.shape_cast %123 : vector<1x6x1x16xf32> to vector<6x16xf32>
    %cst_118 = arith.constant dense<0.000000e+00> : vector<16x16xf32>
    %125 = tpu.matmul %122, %124, %cst_118 {dimension_numbers = #tpu.dot_dimension_numbers<[1], [0], [0], [1], [0, 0, 1, 1], [], []>} : vector<16x6xf32>, vector<6x16xf32>, vector<16x16xf32> -> vector<16x16xf32>
    %126 = vector.broadcast %0 : vector<16x1xf32> to vector<16x16xf32>
    %127 = arith.addf %126, %125 : vector<16x16xf32>
    %c1_119 = arith.constant 1 : index
    %c0_120 = arith.constant 0 : index
    %c0_121 = arith.constant 0 : index
    %128 = vector.load %arg2[%c1_119, %c0_120, %c0_121] : memref<3x16x6xf32, #tpu.memory_space<vmem>>, vector<1x16x6xf32>
    %129 = vector.shape_cast %128 : vector<1x16x6xf32> to vector<16x6xf32>
    %c0_122 = arith.constant 0 : index
    %c0_123 = arith.constant 0 : index
    %c5_124 = arith.constant 5 : index
    %c0_125 = arith.constant 0 : index
    %130 = vector.load %arg1[%c0_122, %c0_123, %c5_124, %c0_125] : memref<1x6x8x16xf32, #tpu.memory_space<vmem>>, vector<1x6x1x16xf32>
    %131 = vector.shape_cast %130 : vector<1x6x1x16xf32> to vector<6x16xf32>
    %cst_126 = arith.constant dense<0.000000e+00> : vector<16x16xf32>
    %132 = tpu.matmul %129, %131, %cst_126 {dimension_numbers = #tpu.dot_dimension_numbers<[1], [0], [0], [1], [0, 0, 1, 1], [], []>} : vector<16x6xf32>, vector<6x16xf32>, vector<16x16xf32> -> vector<16x16xf32>
    %133 = arith.addf %127, %132 : vector<16x16xf32>
    %c2_127 = arith.constant 2 : index
    %c0_128 = arith.constant 0 : index
    %c0_129 = arith.constant 0 : index
    %134 = vector.load %arg2[%c2_127, %c0_128, %c0_129] : memref<3x16x6xf32, #tpu.memory_space<vmem>>, vector<1x16x6xf32>
    %135 = vector.shape_cast %134 : vector<1x16x6xf32> to vector<16x6xf32>
    %c0_130 = arith.constant 0 : index
    %c0_131 = arith.constant 0 : index
    %c6 = arith.constant 6 : index
    %c0_132 = arith.constant 0 : index
    %136 = vector.load %arg1[%c0_130, %c0_131, %c6, %c0_132] : memref<1x6x8x16xf32, #tpu.memory_space<vmem>>, vector<1x6x1x16xf32>
    %137 = vector.shape_cast %136 : vector<1x6x1x16xf32> to vector<6x16xf32>
    %cst_133 = arith.constant dense<0.000000e+00> : vector<16x16xf32>
    %138 = tpu.matmul %135, %137, %cst_133 {dimension_numbers = #tpu.dot_dimension_numbers<[1], [0], [0], [1], [0, 0, 1, 1], [], []>} : vector<16x6xf32>, vector<6x16xf32>, vector<16x16xf32> -> vector<16x16xf32>
    %139 = arith.addf %133, %138 : vector<16x16xf32>
    %140 = vector.extract_strided_slice %139 {offsets = [0, 0], sizes = [4, 16], strides = [1, 1]} : vector<16x16xf32> to vector<4x16xf32>
    %141 = vector.extract_strided_slice %139 {offsets = [8, 0], sizes = [4, 16], strides = [1, 1]} : vector<16x16xf32> to vector<4x16xf32>
    %142 = arith.negf %141 : vector<4x16xf32>
    %143 = math.exp %142 : vector<4x16xf32>
    %cst_134 = arith.constant 1.000000e+00 : f32
    %144 = vector.broadcast %cst_134 : f32 to vector<4x16xf32>
    %145 = arith.addf %144, %143 : vector<4x16xf32>
    %146 = arith.divf %144, %145 : vector<4x16xf32>
    %147 = arith.mulf %140, %146 : vector<4x16xf32>
    %c0_135 = arith.constant 0 : index
    %c0_136 = arith.constant 0 : index
    %c4_137 = arith.constant 4 : index
    %c0_138 = arith.constant 0 : index
    %148 = vector.load %arg4[%c0_135, %c0_136, %c4_137, %c0_138] : memref<1x4x6x16xf32, #tpu.memory_space<vmem>>, vector<1x4x1x16xf32>
    %149 = vector.shape_cast %148 : vector<1x4x1x16xf32> to vector<4x16xf32>
    %150 = vector.shape_cast %147 : vector<4x16xf32> to vector<1x4x1x16xf32>
    tpu.vector_store %arg4[%c0_135, %c0_136, %c4_137, %c0_138], %150 {strides = array<i32>} : memref<1x4x6x16xf32, #tpu.memory_space<vmem>>, vector<1x4x1x16xf32>,
    %c0_139 = arith.constant 0 : index
    %c0_140 = arith.constant 0 : index
    %c0_141 = arith.constant 0 : index
    %151 = vector.load %arg2[%c0_139, %c0_140, %c0_141] : memref<3x16x6xf32, #tpu.memory_space<vmem>>, vector<1x16x6xf32>
    %152 = vector.shape_cast %151 : vector<1x16x6xf32> to vector<16x6xf32>
    %c0_142 = arith.constant 0 : index
    %c0_143 = arith.constant 0 : index
    %c5_144 = arith.constant 5 : index
    %c0_145 = arith.constant 0 : index
    %153 = vector.load %arg1[%c0_142, %c0_143, %c5_144, %c0_145] : memref<1x6x8x16xf32, #tpu.memory_space<vmem>>, vector<1x6x1x16xf32>
    %154 = vector.shape_cast %153 : vector<1x6x1x16xf32> to vector<6x16xf32>
    %cst_146 = arith.constant dense<0.000000e+00> : vector<16x16xf32>
    %155 = tpu.matmul %152, %154, %cst_146 {dimension_numbers = #tpu.dot_dimension_numbers<[1], [0], [0], [1], [0, 0, 1, 1], [], []>} : vector<16x6xf32>, vector<6x16xf32>, vector<16x16xf32> -> vector<16x16xf32>
    %156 = vector.broadcast %0 : vector<16x1xf32> to vector<16x16xf32>
    %157 = arith.addf %156, %155 : vector<16x16xf32>
    %c1_147 = arith.constant 1 : index
    %c0_148 = arith.constant 0 : index
    %c0_149 = arith.constant 0 : index
    %158 = vector.load %arg2[%c1_147, %c0_148, %c0_149] : memref<3x16x6xf32, #tpu.memory_space<vmem>>, vector<1x16x6xf32>
    %159 = vector.shape_cast %158 : vector<1x16x6xf32> to vector<16x6xf32>
    %c0_150 = arith.constant 0 : index
    %c0_151 = arith.constant 0 : index
    %c6_152 = arith.constant 6 : index
    %c0_153 = arith.constant 0 : index
    %160 = vector.load %arg1[%c0_150, %c0_151, %c6_152, %c0_153] : memref<1x6x8x16xf32, #tpu.memory_space<vmem>>, vector<1x6x1x16xf32>
    %161 = vector.shape_cast %160 : vector<1x6x1x16xf32> to vector<6x16xf32>
    %cst_154 = arith.constant dense<0.000000e+00> : vector<16x16xf32>
    %162 = tpu.matmul %159, %161, %cst_154 {dimension_numbers = #tpu.dot_dimension_numbers<[1], [0], [0], [1], [0, 0, 1, 1], [], []>} : vector<16x6xf32>, vector<6x16xf32>, vector<16x16xf32> -> vector<16x16xf32>
    %163 = arith.addf %157, %162 : vector<16x16xf32>
    %c2_155 = arith.constant 2 : index
    %c0_156 = arith.constant 0 : index
    %c0_157 = arith.constant 0 : index
    %164 = vector.load %arg2[%c2_155, %c0_156, %c0_157] : memref<3x16x6xf32, #tpu.memory_space<vmem>>, vector<1x16x6xf32>
    %165 = vector.shape_cast %164 : vector<1x16x6xf32> to vector<16x6xf32>
    %c0_158 = arith.constant 0 : index
    %c0_159 = arith.constant 0 : index
    %c7 = arith.constant 7 : index
    %c0_160 = arith.constant 0 : index
    %166 = vector.load %arg1[%c0_158, %c0_159, %c7, %c0_160] : memref<1x6x8x16xf32, #tpu.memory_space<vmem>>, vector<1x6x1x16xf32>
    %167 = vector.shape_cast %166 : vector<1x6x1x16xf32> to vector<6x16xf32>
    %cst_161 = arith.constant dense<0.000000e+00> : vector<16x16xf32>
    %168 = tpu.matmul %165, %167, %cst_161 {dimension_numbers = #tpu.dot_dimension_numbers<[1], [0], [0], [1], [0, 0, 1, 1], [], []>} : vector<16x6xf32>, vector<6x16xf32>, vector<16x16xf32> -> vector<16x16xf32>
    %169 = arith.addf %163, %168 : vector<16x16xf32>
    %170 = vector.extract_strided_slice %169 {offsets = [0, 0], sizes = [4, 16], strides = [1, 1]} : vector<16x16xf32> to vector<4x16xf32>
    %171 = vector.extract_strided_slice %169 {offsets = [8, 0], sizes = [4, 16], strides = [1, 1]} : vector<16x16xf32> to vector<4x16xf32>
    %172 = arith.negf %171 : vector<4x16xf32>
    %173 = math.exp %172 : vector<4x16xf32>
    %cst_162 = arith.constant 1.000000e+00 : f32
    %174 = vector.broadcast %cst_162 : f32 to vector<4x16xf32>
    %175 = arith.addf %174, %173 : vector<4x16xf32>
    %176 = arith.divf %174, %175 : vector<4x16xf32>
    %177 = arith.mulf %170, %176 : vector<4x16xf32>
    %c0_163 = arith.constant 0 : index
    %c0_164 = arith.constant 0 : index
    %c5_165 = arith.constant 5 : index
    %c0_166 = arith.constant 0 : index
    %178 = vector.load %arg4[%c0_163, %c0_164, %c5_165, %c0_166] : memref<1x4x6x16xf32, #tpu.memory_space<vmem>>, vector<1x4x1x16xf32>
    %179 = vector.shape_cast %178 : vector<1x4x1x16xf32> to vector<4x16xf32>
    %180 = vector.shape_cast %177 : vector<4x16xf32> to vector<1x4x1x16xf32>
    tpu.vector_store %arg4[%c0_163, %c0_164, %c5_165, %c0_166], %180 {strides = array<i32>} : memref<1x4x6x16xf32, #tpu.memory_space<vmem>>, vector<1x4x1x16xf32>,
    return
  }
  func.func @transform_0(%arg0: i32) -> (i32, i32, i32, i32) {
    %c0_i32 = arith.constant 0 : i32
    %c0_i32_0 = arith.constant 0 : i32
    %c0_i32_1 = arith.constant 0 : i32
    %c0_i32_2 = arith.constant 0 : i32
    return %arg0, %c0_i32, %c0_i32_0, %c0_i32_1 : i32, i32, i32, i32
  }
  func.func @transform_1(%arg0: i32) -> (i32, i32, i32) {
    %c0_i32 = arith.constant 0 : i32
    %c0_i32_0 = arith.constant 0 : i32
    %c0_i32_1 = arith.constant 0 : i32
    %c0_i32_2 = arith.constant 0 : i32
    return %c0_i32, %c0_i32_0, %c0_i32_1 : i32, i32, i32
  }
  func.func @transform_2(%arg0: i32) -> (i32, i32) {
    %c0_i32 = arith.constant 0 : i32
    %c0_i32_0 = arith.constant 0 : i32
    %c0_i32_1 = arith.constant 0 : i32
    return %c0_i32, %c0_i32_0 : i32, i32
  }
  func.func @transform_3(%arg0: i32) -> (i32, i32, i32, i32) {
    %c0_i32 = arith.constant 0 : i32
    %c0_i32_0 = arith.constant 0 : i32
    %c0_i32_1 = arith.constant 0 : i32
    %c0_i32_2 = arith.constant 0 : i32
    return %arg0, %c0_i32, %c0_i32_0, %c0_i32_1 : i32, i32, i32, i32
  }
}

</mosaic_0001>

<llo_original>
// kernel: tpu_custom_call.1
$region0: #{tpu_custom_call.1}
  #allocation0 [shape = 'u32[]', space=smem, size = 0x4, offset = 0x4, fixed_abs, tag = 'smem constant byte address 0x4 - core index']
  #allocation1 [shape = 'u32[144,128]{1,0:T(1,128)}', space=vmem, size = 0x12000, scoped, tag = 'internal scratch']
  %s0 = inlined_call_operand.hbm [shape: f32[2,6,8,16], index: 0, kind: input, shape index: {}]
  %s1 = inlined_call_operand.vmem [shape: f32[3,16,6], index: 1, kind: input, shape index: {}]
  %s2 = inlined_call_operand.vmem [shape: f32[16,1], index: 2, kind: input, shape index: {}]
  %s3 = inlined_call_operand.vmem [shape: f32[2,4,6,16], index: 3, kind: output, shape index: {}]
  %s4 = sld [smem:[#allocation0]]
  $region49: #{tpu_custom_call.1} parent=0
    _
  %s6 = ssub.s32 1, %s4
  %s7 = scalar_select 0, %s6, %s4
  $region1: #{tpu_custom_call.1} parent=0
    #allocation2 [shape = 'u8[49152]{0}', space=vmem, size = 0xc000, scoped, tag = 'input window, operand 0']
    #allocation3 [shape = 's32[2]{0}', space=sflag, size = 0x8, scoped, tag = 'scoped memory for tpu_custom_call.1']
    %8 = vsyncpa [#allocation3], 0
    %s9 = scalar_lea.sflag [#allocation3], 1
    %10 = vsyncpa %s9, 0
    loop: start=0, step=1, limit=4
    $region2: #{tpu_custom_call.1} parent=1 // loop_pre_header
      _
    $region3: #{tpu_custom_call.1} parent=1 // loop_header
      %s12 = sphi 0, %s16
      %p13 = scmp.ge.s32.totalorder %s12, 4
      %s22 = sphi 0, %s24
      %s25 = sphi 0, %s22
      %s26 = sphi 0, %s25
      %s42 = sphi 0, %s26
      %s46 = sphi 0, %s46
      %s48 = sphi 0, %s46
      %s49 = sphi 0, %s48
      %s63 = sphi 0, %s49
      %s67 = sphi 0, %s67
      %s69 = sphi 0, %s67
      %s70 = sphi 0, %s69
      %s84 = sphi 0, %s70
      %s90 = sphi 0, %s92
      %s93 = sphi 0, %s90
      %s94 = sphi 0, %s93
      %s110 = sphi 0, %s94
    $region4: #{tpu_custom_call.1} parent=1 // loop_header_branch
      %15 = sbr.rel (%p13) target = $region8
    $region5: #{tpu_custom_call.1} parent=1 // loop_body
      %s17 = ssub.s32 %s12, 1
      %s18 = ssub.s32 %s12, 2
      %s19 = sadd.s32 %s12, 1
      %s20 = ssub.s32 %s12, %s19
      %p21 = scmp.eq.s32.totalorder %s20, 0
      %s23 = sadd.s32 %s22, 1
      %s24 = scalar_select %p21, %s22, %s23
      %p27 = pneg %p21
      %p28 = scmp.eq.s32.totalorder %s12, 1
      %p29 = por %p27, %p28
      %p30 = scmp.ne.s32.totalorder %s22, %s25
      %p31 = scmp.eq.s32.totalorder %s12, 0
      %p32 = por %p30, %p31
      %p33 = scmp.ne.s32.totalorder %s22, %s25
      %p34 = scmp.eq.s32.totalorder %s17, 1
      %p35 = por %p33, %p34
      %p36 = scmp.ne.s32.totalorder %s25, %s26
      %p37 = scmp.eq.s32.totalorder %s17, 0
      %p38 = por %p36, %p37
      %p39 = scmp.ne.s32.totalorder %s25, %s26
      %p40 = scmp.eq.s32.totalorder %s18, 1
      %p41 = por %p39, %p40
      %p43 = scmp.ne.s32.totalorder %s26, %s42
      %p44 = scmp.eq.s32.totalorder %s18, 0
      %p45 = por %p43, %p44
      %s47 = sadd.s32 %s46, 1
      %p50 = scmp.eq.s32.totalorder %s12, 1
      %p51 = scmp.ne.s32.totalorder %s46, %s48
      %p52 = scmp.eq.s32.totalorder %s12, 0
      %p53 = por %p51, %p52
      %p54 = scmp.ne.s32.totalorder %s46, %s48
      %p55 = scmp.eq.s32.totalorder %s17, 1
      %p56 = por %p54, %p55
      %p57 = scmp.ne.s32.totalorder %s48, %s49
      %p58 = scmp.eq.s32.totalorder %s17, 0
      %p59 = por %p57, %p58
      %p60 = scmp.ne.s32.totalorder %s48, %s49
      %p61 = scmp.eq.s32.totalorder %s18, 1
      %p62 = por %p60, %p61
      %p64 = scmp.ne.s32.totalorder %s49, %s63
      %p65 = scmp.eq.s32.totalorder %s18, 0
      %p66 = por %p64, %p65
      %s68 = sadd.s32 %s67, 1
      %p71 = scmp.eq.s32.totalorder %s12, 1
      %p72 = scmp.ne.s32.totalorder %s67, %s69
      %p73 = scmp.eq.s32.totalorder %s12, 0
      %p74 = por %p72, %p73
      %p75 = scmp.ne.s32.totalorder %s67, %s69
      %p76 = scmp.eq.s32.totalorder %s17, 1
      %p77 = por %p75, %p76
      %p78 = scmp.ne.s32.totalorder %s69, %s70
      %p79 = scmp.eq.s32.totalorder %s17, 0
      %p80 = por %p78, %p79
      %p81 = scmp.ne.s32.totalorder %s69, %s70
      %p82 = scmp.eq.s32.totalorder %s18, 1
      %p83 = por %p81, %p82
      %p85 = scmp.ne.s32.totalorder %s70, %s84
      %p86 = scmp.eq.s32.totalorder %s18, 0
      %p87 = por %p85, %p86
      %s88 = ssub.s32 %s12, %s19
      %p89 = scmp.eq.s32.totalorder %s88, 0
      %s91 = sadd.s32 %s90, 1
      %s92 = scalar_select %p89, %s90, %s91
      %p95 = pneg %p89
      %p96 = scmp.eq.s32.totalorder %s12, 1
      %p97 = por %p95, %p96
      %p98 = scmp.ne.s32.totalorder %s90, %s93
      %p99 = scmp.eq.s32.totalorder %s12, 0
      %p100 = por %p98, %p99
      %p101 = scmp.ne.s32.totalorder %s90, %s93
      %p102 = scmp.eq.s32.totalorder %s17, 1
      %p103 = por %p101, %p102
      %p104 = scmp.ne.s32.totalorder %s93, %s94
      %p105 = scmp.eq.s32.totalorder %s17, 0
      %p106 = por %p104, %p105
      %p107 = scmp.ne.s32.totalorder %s93, %s94
      %p108 = scmp.eq.s32.totalorder %s18, 1
      %p109 = por %p107, %p108
      %p111 = scmp.ne.s32.totalorder %s94, %s110
      %p112 = scmp.eq.s32.totalorder %s18, 0
      %p113 = por %p111, %p112
      %p114 = scmp.le.s32.totalorder 1, %s12
      %p115 = scmp.lt.s32.totalorder %s12, 3
      %p116 = pnand %p114, %p115
      %p117 = pneg %p116
      // Predicated region
      $region9: #{tpu_custom_call.1} parent=5 // pred_check
        _
      $region10: #{tpu_custom_call.1} parent=5 // pred_check_branch
        %119 = sbr.rel (%p116) target = $region12
      $region11: #{tpu_custom_call.1} parent=5 // pred_region
        %s120 = ssub.s32 %s12, 1
        // Predicated region
        $region13: #{tpu_custom_call.1} parent=11 // pred_check
          %p121 = pneg %p59
        $region14: #{tpu_custom_call.1} parent=11 // pred_check_branch
          %123 = sbr.rel (%p121) target = $region16
        $region15: #{tpu_custom_call.1} parent=11 // pred_region
          _
        $region16: #{tpu_custom_call.1} parent=11 // pred_fallthru
          _
        // Predicated region
        $region17: #{tpu_custom_call.1} parent=11 // pred_check
          %p124 = pneg %p80
        $region18: #{tpu_custom_call.1} parent=11 // pred_check_branch
          %126 = sbr.rel (%p124) target = $region20
        $region19: #{tpu_custom_call.1} parent=11 // pred_region
          _
        $region20: #{tpu_custom_call.1} parent=11 // pred_fallthru
          _
      $region12: #{tpu_custom_call.1} parent=5 // pred_fallthru
        _
      %p127 = scmp.lt.s32.totalorder %s12, 2
      // Predicated region
      $region21: #{tpu_custom_call.1} parent=5 // pred_check
        %p128 = pneg %p127
      $region22: #{tpu_custom_call.1} parent=5 // pred_check_branch
        %130 = sbr.rel (%p128) target = $region24
      $region23: #{tpu_custom_call.1} parent=5 // pred_region
        // Predicated region
        $region25: #{tpu_custom_call.1} parent=23 // pred_check
          %p131 = pneg %p32
        $region26: #{tpu_custom_call.1} parent=23 // pred_check_branch
          %133 = sbr.rel (%p131) target = $region28
        $region27: #{tpu_custom_call.1} parent=23 // pred_region
          %s134 = sand.u32 %s22, 1
          %s135 = scalar_lea.sflag [#allocation3], %s134
          %s136 = sand.u32 %s22, 1
          %s137 = smul.addr %s136, 48
          %s138 = scalar_lea.vmem [#allocation2], %s137
          %s140 = ssub.s32 768, 768
          %141 = vsyncadd %s135, %s140
          %s142 = smul.addr %s12, 6
          %s143 = smul.addr %s142, 128
          %s144 = scalar_lea.hbm %s0, %s143
          %s145 = sshll.u32 %s138, 4
          %s146 = int_to_ptr.vmem [resolvable:$true] %s145
          %151 = dma.hbm_to_vmem [thread:$0]  %s144, 768, %s146, %s135, 128, 128, 8
        $region28: #{tpu_custom_call.1} parent=23 // pred_fallthru
          _
      $region24: #{tpu_custom_call.1} parent=5 // pred_fallthru
        _
      %p152 = scmp.le.s32.totalorder 1, %s12
      %p153 = scmp.lt.s32.totalorder %s12, 3
      %p154 = pnand %p152, %p153
      %p155 = pneg %p154
      // Predicated region
      $region29: #{tpu_custom_call.1} parent=5 // pred_check
        _
      $region30: #{tpu_custom_call.1} parent=5 // pred_check_branch
        %157 = sbr.rel (%p154) target = $region32
      $region31: #{tpu_custom_call.1} parent=5 // pred_region
        %s158 = ssub.s32 %s12, 1
        %s159 = sand.u32 %s25, 1
        %s160 = scalar_lea.sflag [#allocation3], %s159
        %s161 = sand.u32 %s25, 1
        %s162 = smul.addr %s161, 48
        %s163 = scalar_lea.vmem [#allocation2], %s162
        // Predicated region
        $region33: #{tpu_custom_call.1} parent=31 // pred_check
          %p164 = pneg %p38
        $region34: #{tpu_custom_call.1} parent=31 // pred_check_branch
          %166 = sbr.rel (%p164) target = $region36
        $region35: #{tpu_custom_call.1} parent=31 // pred_region
          %167 = dma.done %s160, 768
        $region36: #{tpu_custom_call.1} parent=31 // pred_fallthru
          _
        %s168 = sand.u32 %s25, 1
        %s169 = scalar_lea.sflag [#allocation3], %s168
        %s170 = sand.u32 %s25, 1
        %s171 = smul.addr %s170, 48
        %s172 = scalar_lea.vmem [#allocation2], %s171
        %p173 = pneg %p38
        %p174 = pneg %p35
        %p175 = pneg %p59
        %p176 = pneg %p56
        %p177 = pneg %p80
        %p178 = pneg %p77
        %p179 = pneg %p106
        %p180 = pneg %p103
        %p181 = scmp.lt.s32.totalorder %s17, 1
        %s182 = scalar_select %p181, %s17, 1
        %s183 = smul.addr %s182, 4
        %s184 = smul.addr %s183, 8
        %s185 = scalar_lea.vmem %s3, %s184
        %p186 = scmp.lt.s32.totalorder %s17, 1
        %s187 = scalar_select %p186, %s17, 1
        %s188 = smul.addr %s187, 4
        %s189 = smul.addr %s188, 8
        %s190 = scalar_lea.vmem %s3, %s189
        %v191 = vld [vmem:[%s2] sm:$0xff]
        %v192 = vld [vmem:[%s2 + $0x8] sm:$0xff]
        %v193 = vld [vmem:[%s1] sm:$0xff]
        %v194 = vld [vmem:[%s1 + $0x8] sm:$0xff]
        %v195 = vld [vmem:[%s163] sm:$0x1]
        %v196 = vld [vmem:[%s163 + $0x8] sm:$0x1]
        %v197 = vld [vmem:[%s163 + $0x10] sm:$0x1]
        %v198 = vld [vmem:[%s163 + $0x18] sm:$0x1]
        %v199 = vld [vmem:[%s163 + $0x20] sm:$0x1]
        %v200 = vld [vmem:[%s163 + $0x28] sm:$0x1]
        %v207 = vrot.slane %v196, 7
        %vm208 = vcmask 1041409
        %v209 = vsel %vm208, %v207, %v195
        %v210 = vrot.slane %v197, 6
        %vm211 = vcmask 1042434
        %v212 = vsel %vm211, %v210, %v209
        %v213 = vrot.slane %v198, 5
        %vm214 = vcmask 1043459
        %v215 = vsel %vm214, %v213, %v212
        %v216 = vrot.slane %v199, 4
        %vm217 = vcmask 1044484
        %v218 = vsel %vm217, %v216, %v215
        %v219 = vrot.slane %v200, 3
        %vm220 = vcmask 1045509
        %v221 = vsel %vm220, %v219, %v218
        %vm222 = vcmask 48128
        %v224 = vsel %vm222, %v193, 0
        %v227 = vsel %vm222, %v194, 0
        %vm229 = vcmask 1045504
        %v230 = vsel %vm229, %v221, 0
        %232 = vmatprep.subr.mxu0 0.0
        %233 = vmatpush1.msra.mxu0 %v230
        %234 = vmatprep.subr.mxu0 0.0
        %235 = vmatpush1.msra.mxu0 0.0
        %236 = vmatprep.subr.mxu0 0.0
        %237 = vmatpush1.msra.mxu0 0.0
        %238 = vmatprep.subr.mxu0 0.0
        %239 = vmatpush1.msra.mxu0 0.0
        %240 = vmatprep.subr.mxu0 0.0
        %241 = vmatpush1.msra.mxu0 0.0
        %242 = vmatprep.subr.mxu0 0.0
        %243 = vmatpush1.msra.mxu0 0.0
        %244 = vmatprep.subr.mxu0 0.0
        %245 = vmatpush1.msra.mxu0 0.0
        %246 = vmatprep.subr.mxu0 0.0
        %247 = vmatpush1.msra.mxu0 0.0
        %248 = vmatprep.subr.mxu0 0.0
        %249 = vmatpush1.msra.mxu0 0.0
        %250 = vmatprep.subr.mxu0 0.0
        %251 = vmatpush1.msra.mxu0 0.0
        %252 = vmatprep.subr.mxu0 0.0
        %253 = vmatpush1.msra.mxu0 0.0
        %254 = vmatprep.subr.mxu0 0.0
        %255 = vmatpush1.msra.mxu0 0.0
        %256 = vmatprep.subr.mxu0 0.0
        %257 = vmatpush1.msra.mxu0 0.0
        %258 = vmatprep.subr.mxu0 0.0
        %259 = vmatpush1.msra.mxu0 0.0
        %260 = vmatprep.subr.mxu0 0.0
        %261 = vmatpush1.msra.mxu0 0.0
        %262 = vmatprep.subr.mxu0 0.0
        %263 = vmatpush1.msra.mxu0 0.0
        %264 = vmatprep.subr.mxu0 0.0
        %265 = vmatpush1.msra.mxu0 0.0
        %266 = vmatprep.subr.mxu0 0.0
        %267 = vmatpush1.msra.mxu0 0.0
        %268 = vmatprep.subr.mxu0 0.0
        %269 = vmatpush1.msra.mxu0 0.0
        %270 = vmatprep.subr.mxu0 0.0
        %271 = vmatpush1.msra.mxu0 0.0
        %272 = vmatprep.subr.mxu0 0.0
        %273 = vmatpush1.msra.mxu0 0.0
        %274 = vmatprep.subr.mxu0 0.0
        %275 = vmatpush1.msra.mxu0 0.0
        %276 = vmatprep.subr.mxu0 0.0
        %277 = vmatpush1.msra.mxu0 0.0
        %278 = vmatprep.subr.mxu0 0.0
        %279 = vmatpush1.msra.mxu0 0.0
        %280 = vmatprep.subr.mxu0 0.0
        %281 = vmatpush1.msra.mxu0 0.0
        %282 = vmatprep.subr.mxu0 0.0
        %283 = vmatpush1.msra.mxu0 0.0
        %284 = vmatprep.subr.mxu0 0.0
        %285 = vmatpush1.msra.mxu0 0.0
        %286 = vmatprep.subr.mxu0 0.0
        %287 = vmatpush1.msra.mxu0 0.0
        %288 = vmatprep.subr.mxu0 0.0
        %289 = vmatpush1.msra.mxu0 0.0
        %290 = vmatprep.subr.mxu0 0.0
        %291 = vmatpush1.msra.mxu0 0.0
        %292 = vmatprep.subr.mxu0 0.0
        %293 = vmatpush1.msra.mxu0 0.0
        %294 = vmatprep.subr.mxu0 0.0
        %295 = vmatpush1.msra.mxu0 0.0
        %296 = vmatprep.mubr.f32.mxu0 0.0
        %297 = vmatmul.mubr.f32.gmra.mrb[0].mxu0 %v224
        %v298 = vpop.f32.mrb[0].mxu0
        %v299 = vadd.f32 0.0, %v298
        %v300 = vpop.f32.mrb[0].mxu0
        %301 = vmatprep.mubr.f32.mxu0 0.0
        %302 = vmatmul.mubr.f32.gmra.mrb[0].mxu0 %v227
        %v303 = vpop.f32.mrb[0].mxu0
        %v304 = vadd.f32 0.0, %v303
        %v305 = vpop.f32.mrb[0].mxu0
        %306 = vdwg.mxu0
        %308 = vset.pattern.permute.xlu0 0
        %309 = vperm.xlu0 %308, %v191
        %v310 = vpop.permute.xlu0 %309
        %313 = vset.pattern.permute.xlu0 0
        %314 = vperm.xlu0 %313, %v192
        %v315 = vpop.permute.xlu0 %314
        %v317 = vadd.f32 %v310, %v299
        %v318 = vadd.f32 %v315, %v304
        %s319 = scalar_lea.vmem %s1, 16
        %v320 = vld [vmem:[%s319] sm:$0xff]
        %v321 = vld [vmem:[%s319 + $0x8] sm:$0xff]
        %v322 = vld [vmem:[%s163 + $0x1] sm:$0x1]
        %v323 = vld [vmem:[%s163 + $0x9] sm:$0x1]
        %v324 = vld [vmem:[%s163 + $0x11] sm:$0x1]
        %v325 = vld [vmem:[%s163 + $0x19] sm:$0x1]
        %v326 = vld [vmem:[%s163 + $0x21] sm:$0x1]
        %v327 = vld [vmem:[%s163 + $0x29] sm:$0x1]
        %v334 = vrot.slane %v323, 7
        %v335 = vsel %vm208, %v334, %v322
        %v336 = vrot.slane %v324, 6
        %v337 = vsel %vm211, %v336, %v335
        %v338 = vrot.slane %v325, 5
        %v339 = vsel %vm214, %v338, %v337
        %v340 = vrot.slane %v326, 4
        %v341 = vsel %vm217, %v340, %v339
        %v342 = vrot.slane %v327, 3
        %v343 = vsel %vm220, %v342, %v341
        %v345 = vsel %vm222, %v320, 0
        %v348 = vsel %vm222, %v321, 0
        %v350 = vsel %vm229, %v343, 0
        %352 = vmatprep.subr.mxu0 0.0
        %353 = vmatpush1.msra.mxu0 %v350
        %354 = vmatprep.subr.mxu0 0.0
        %355 = vmatpush1.msra.mxu0 0.0
        %356 = vmatprep.subr.mxu0 0.0
        %357 = vmatpush1.msra.mxu0 0.0
        %358 = vmatprep.subr.mxu0 0.0
        %359 = vmatpush1.msra.mxu0 0.0
        %360 = vmatprep.subr.mxu0 0.0
        %361 = vmatpush1.msra.mxu0 0.0
        %362 = vmatprep.subr.mxu0 0.0
        %363 = vmatpush1.msra.mxu0 0.0
        %364 = vmatprep.subr.mxu0 0.0
        %365 = vmatpush1.msra.mxu0 0.0
        %366 = vmatprep.subr.mxu0 0.0
        %367 = vmatpush1.msra.mxu0 0.0
        %368 = vmatprep.subr.mxu0 0.0
        %369 = vmatpush1.msra.mxu0 0.0
        %370 = vmatprep.subr.mxu0 0.0
        %371 = vmatpush1.msra.mxu0 0.0
        %372 = vmatprep.subr.mxu0 0.0
        %373 = vmatpush1.msra.mxu0 0.0
        %374 = vmatprep.subr.mxu0 0.0
        %375 = vmatpush1.msra.mxu0 0.0
        %376 = vmatprep.subr.mxu0 0.0
        %377 = vmatpush1.msra.mxu0 0.0
        %378 = vmatprep.subr.mxu0 0.0
        %379 = vmatpush1.msra.mxu0 0.0
        %380 = vmatprep.subr.mxu0 0.0
        %381 = vmatpush1.msra.mxu0 0.0
        %382 = vmatprep.subr.mxu0 0.0
        %383 = vmatpush1.msra.mxu0 0.0
        %384 = vmatprep.subr.mxu0 0.0
        %385 = vmatpush1.msra.mxu0 0.0
        %386 = vmatprep.subr.mxu0 0.0
        %387 = vmatpush1.msra.mxu0 0.0
        %388 = vmatprep.subr.mxu0 0.0
        %389 = vmatpush1.msra.mxu0 0.0
        %390 = vmatprep.subr.mxu0 0.0
        %391 = vmatpush1.msra.mxu0 0.0
        %392 = vmatprep.subr.mxu0 0.0
        %393 = vmatpush1.msra.mxu0 0.0
        %394 = vmatprep.subr.mxu0 0.0
        %395 = vmatpush1.msra.mxu0 0.0
        %396 = vmatprep.subr.mxu0 0.0
        %397 = vmatpush1.msra.mxu0 0.0
        %398 = vmatprep.subr.mxu0 0.0
        %399 = vmatpush1.msra.mxu0 0.0
        %400 = vmatprep.subr.mxu0 0.0
        %401 = vmatpush1.msra.mxu0 0.0
        %402 = vmatprep.subr.mxu0 0.0
        %403 = vmatpush1.msra.mxu0 0.0
        %404 = vmatprep.subr.mxu0 0.0
        %405 = vmatpush1.msra.mxu0 0.0
        %406 = vmatprep.subr.mxu0 0.0
        %407 = vmatpush1.msra.mxu0 0.0
        %408 = vmatprep.subr.mxu0 0.0
        %409 = vmatpush1.msra.mxu0 0.0
        %410 = vmatprep.subr.mxu0 0.0
        %411 = vmatpush1.msra.mxu0 0.0
        %412 = vmatprep.subr.mxu0 0.0
        %413 = vmatpush1.msra.mxu0 0.0
        %414 = vmatprep.subr.mxu0 0.0
        %415 = vmatpush1.msra.mxu0 0.0
        %416 = vmatprep.mubr.f32.mxu0 0.0
        %417 = vmatmul.mubr.f32.gmra.mrb[0].mxu0 %v345
        %v418 = vpop.f32.mrb[0].mxu0
        %v419 = vadd.f32 0.0, %v418
        %v420 = vpop.f32.mrb[0].mxu0
        %421 = vmatprep.mubr.f32.mxu0 0.0
        %422 = vmatmul.mubr.f32.gmra.mrb[0].mxu0 %v348
        %v423 = vpop.f32.mrb[0].mxu0
        %v424 = vadd.f32 0.0, %v423
        %v425 = vpop.f32.mrb[0].mxu0
        %426 = vdwg.mxu0
        %v427 = vadd.f32 %v317, %v419
        %v428 = vadd.f32 %v318, %v424
        %s429 = scalar_lea.vmem %s1, 32
        %v430 = vld [vmem:[%s429] sm:$0xff]
        %v431 = vld [vmem:[%s429 + $0x8] sm:$0xff]
        %v432 = vld [vmem:[%s163 + $0x2] sm:$0x1]
        %v433 = vld [vmem:[%s163 + $0xa] sm:$0x1]
        %v434 = vld [vmem:[%s163 + $0x12] sm:$0x1]
        %v435 = vld [vmem:[%s163 + $0x1a] sm:$0x1]
        %v436 = vld [vmem:[%s163 + $0x22] sm:$0x1]
        %v437 = vld [vmem:[%s163 + $0x2a] sm:$0x1]
        %v444 = vrot.slane %v433, 7
        %v445 = vsel %vm208, %v444, %v432
        %v446 = vrot.slane %v434, 6
        %v447 = vsel %vm211, %v446, %v445
        %v448 = vrot.slane %v435, 5
        %v449 = vsel %vm214, %v448, %v447
        %v450 = vrot.slane %v436, 4
        %v451 = vsel %vm217, %v450, %v449
        %v452 = vrot.slane %v437, 3
        %v453 = vsel %vm220, %v452, %v451
        %v455 = vsel %vm222, %v430, 0
        %v458 = vsel %vm222, %v431, 0
        %v460 = vsel %vm229, %v453, 0
        %462 = vmatprep.subr.mxu0 0.0
        %463 = vmatpush1.msra.mxu0 %v460
        %464 = vmatprep.subr.mxu0 0.0
        %465 = vmatpush1.msra.mxu0 0.0
        %466 = vmatprep.subr.mxu0 0.0
        %467 = vmatpush1.msra.mxu0 0.0
        %468 = vmatprep.subr.mxu0 0.0
        %469 = vmatpush1.msra.mxu0 0.0
        %470 = vmatprep.subr.mxu0 0.0
        %471 = vmatpush1.msra.mxu0 0.0
        %472 = vmatprep.subr.mxu0 0.0
        %473 = vmatpush1.msra.mxu0 0.0
        %474 = vmatprep.subr.mxu0 0.0
        %475 = vmatpush1.msra.mxu0 0.0
        %476 = vmatprep.subr.mxu0 0.0
        %477 = vmatpush1.msra.mxu0 0.0
        %478 = vmatprep.subr.mxu0 0.0
        %479 = vmatpush1.msra.mxu0 0.0
        %480 = vmatprep.subr.mxu0 0.0
        %481 = vmatpush1.msra.mxu0 0.0
        %482 = vmatprep.subr.mxu0 0.0
        %483 = vmatpush1.msra.mxu0 0.0
        %484 = vmatprep.subr.mxu0 0.0
        %485 = vmatpush1.msra.mxu0 0.0
        %486 = vmatprep.subr.mxu0 0.0
        %487 = vmatpush1.msra.mxu0 0.0
        %488 = vmatprep.subr.mxu0 0.0
        %489 = vmatpush1.msra.mxu0 0.0
        %490 = vmatprep.subr.mxu0 0.0
        %491 = vmatpush1.msra.mxu0 0.0
        %492 = vmatprep.subr.mxu0 0.0
        %493 = vmatpush1.msra.mxu0 0.0
        %494 = vmatprep.subr.mxu0 0.0
        %495 = vmatpush1.msra.mxu0 0.0
        %496 = vmatprep.subr.mxu0 0.0
        %497 = vmatpush1.msra.mxu0 0.0
        %498 = vmatprep.subr.mxu0 0.0
        %499 = vmatpush1.msra.mxu0 0.0
        %500 = vmatprep.subr.mxu0 0.0
        %501 = vmatpush1.msra.mxu0 0.0
        %502 = vmatprep.subr.mxu0 0.0
        %503 = vmatpush1.msra.mxu0 0.0
        %504 = vmatprep.subr.mxu0 0.0
        %505 = vmatpush1.msra.mxu0 0.0
        %506 = vmatprep.subr.mxu0 0.0
        %507 = vmatpush1.msra.mxu0 0.0
        %508 = vmatprep.subr.mxu0 0.0
        %509 = vmatpush1.msra.mxu0 0.0
        %510 = vmatprep.subr.mxu0 0.0
        %511 = vmatpush1.msra.mxu0 0.0
        %512 = vmatprep.subr.mxu0 0.0
        %513 = vmatpush1.msra.mxu0 0.0
        %514 = vmatprep.subr.mxu0 0.0
        %515 = vmatpush1.msra.mxu0 0.0
        %516 = vmatprep.subr.mxu0 0.0
        %517 = vmatpush1.msra.mxu0 0.0
        %518 = vmatprep.subr.mxu0 0.0
        %519 = vmatpush1.msra.mxu0 0.0
        %520 = vmatprep.subr.mxu0 0.0
        %521 = vmatpush1.msra.mxu0 0.0
        %522 = vmatprep.subr.mxu0 0.0
        %523 = vmatpush1.msra.mxu0 0.0
        %524 = vmatprep.subr.mxu0 0.0
        %525 = vmatpush1.msra.mxu0 0.0
        %526 = vmatprep.mubr.f32.mxu0 0.0
        %527 = vmatmul.mubr.f32.gmra.mrb[0].mxu0 %v455
        %v528 = vpop.f32.mrb[0].mxu0
        %v529 = vadd.f32 0.0, %v528
        %v530 = vpop.f32.mrb[0].mxu0
        %531 = vmatprep.mubr.f32.mxu0 0.0
        %532 = vmatmul.mubr.f32.gmra.mrb[0].mxu0 %v458
        %v533 = vpop.f32.mrb[0].mxu0
        %v534 = vadd.f32 0.0, %v533
        %v535 = vpop.f32.mrb[0].mxu0
        %536 = vdwg.mxu0
        %v537 = vadd.f32 %v427, %v529
        %v538 = vadd.f32 %v428, %v534
        %v539 = vxor.u32 %v538, 2147483648
        %v540 = vmul.f32 %v539, 1.442695
        %v541 = vpow.pop %v540
        %v542 = vadd.f32 %v541, 1.0
        %v543 = vrcp.pop %v542
        %v544 = vmul.f32 1.0, %v543
        %v545 = vmul.f32 %v537, %v544
        %v548 = vunpack.c.l.s4 1966171168
        %v549 = vunpack.c.0.s8 %v548
        %v550 = vlaneseq
        %v551 = vshrl.u32 %v550, 7
        %v552 = vsub.s32 %v549, %v551
        %v553 = vrot.slane %v545, %v552
        %v554 = vcombine.high %v553, %v553
        %v556 = vunpack.c.l.s4 1966171168
        %v557 = vunpack.c.0.s8 %v556
        %v558 = vlaneseq
        %v559 = vshrl.u32 %v558, 7
        %v560 = vsub.s32 %v557, %v559
        %v561 = vrot.slane %v553, %v560
        %v563 = vunpack.c.l.s4 1966171168
        %v564 = vunpack.c.0.s8 %v563
        %v565 = vlaneseq
        %v566 = vshrl.u32 %v565, 7
        %v567 = vsub.s32 %v564, %v566
        %v568 = vrot.slane %v554, %v567
        %v569 = vcombine.high %v561, %v561
        %v570 = vcombine.high %v568, %v568
        %vm575 = vcmask 122880
        %576 = vst.msk [vmem:[%s190] sm:$0x1] %vm575, %v561
        %577 = vst.msk [vmem:[%s190 + $0x8] sm:$0x1] %vm575, %v568
        %578 = vst.msk [vmem:[%s190 + $0x10] sm:$0x1] %vm575, %v569
        %579 = vst.msk [vmem:[%s190 + $0x18] sm:$0x1] %vm575, %v570
        %v580 = vld [vmem:[%s1] sm:$0xff]
        %v581 = vld [vmem:[%s1 + $0x8] sm:$0xff]
        %v582 = vld [vmem:[%s163 + $0x1] sm:$0x1]
        %v583 = vld [vmem:[%s163 + $0x9] sm:$0x1]
        %v584 = vld [vmem:[%s163 + $0x11] sm:$0x1]
        %v585 = vld [vmem:[%s163 + $0x19] sm:$0x1]
        %v586 = vld [vmem:[%s163 + $0x21] sm:$0x1]
        %v587 = vld [vmem:[%s163 + $0x29] sm:$0x1]
        %v594 = vrot.slane %v583, 7
        %v595 = vsel %vm208, %v594, %v582
        %v596 = vrot.slane %v584, 6
        %v597 = vsel %vm211, %v596, %v595
        %v598 = vrot.slane %v585, 5
        %v599 = vsel %vm214, %v598, %v597
        %v600 = vrot.slane %v586, 4
        %v601 = vsel %vm217, %v600, %v599
        %v602 = vrot.slane %v587, 3
        %v603 = vsel %vm220, %v602, %v601
        %v605 = vsel %vm222, %v580, 0
        %v608 = vsel %vm222, %v581, 0
        %v610 = vsel %vm229, %v603, 0
        %612 = vmatprep.subr.mxu0 0.0
        %613 = vmatpush1.msra.mxu0 %v610
        %614 = vmatprep.subr.mxu0 0.0
        %615 = vmatpush1.msra.mxu0 0.0
        %616 = vmatprep.subr.mxu0 0.0
        %617 = vmatpush1.msra.mxu0 0.0
        %618 = vmatprep.subr.mxu0 0.0
        %619 = vmatpush1.msra.mxu0 0.0
        %620 = vmatprep.subr.mxu0 0.0
        %621 = vmatpush1.msra.mxu0 0.0
        %622 = vmatprep.subr.mxu0 0.0
        %623 = vmatpush1.msra.mxu0 0.0
        %624 = vmatprep.subr.mxu0 0.0
        %625 = vmatpush1.msra.mxu0 0.0
        %626 = vmatprep.subr.mxu0 0.0
        %627 = vmatpush1.msra.mxu0 0.0
        %628 = vmatprep.subr.mxu0 0.0
        %629 = vmatpush1.msra.mxu0 0.0
        %630 = vmatprep.subr.mxu0 0.0
        %631 = vmatpush1.msra.mxu0 0.0
        %632 = vmatprep.subr.mxu0 0.0
        %633 = vmatpush1.msra.mxu0 0.0
        %634 = vmatprep.subr.mxu0 0.0
        %635 = vmatpush1.msra.mxu0 0.0
        %636 = vmatprep.subr.mxu0 0.0
        %637 = vmatpush1.msra.mxu0 0.0
        %638 = vmatprep.subr.mxu0 0.0
        %639 = vmatpush1.msra.mxu0 0.0
        %640 = vmatprep.subr.mxu0 0.0
        %641 = vmatpush1.msra.mxu0 0.0
        %642 = vmatprep.subr.mxu0 0.0
        %643 = vmatpush1.msra.mxu0 0.0
        %644 = vmatprep.subr.mxu0 0.0
        %645 = vmatpush1.msra.mxu0 0.0
        %646 = vmatprep.subr.mxu0 0.0
        %647 = vmatpush1.msra.mxu0 0.0
        %648 = vmatprep.subr.mxu0 0.0
        %649 = vmatpush1.msra.mxu0 0.0
        %650 = vmatprep.subr.mxu0 0.0
        %651 = vmatpush1.msra.mxu0 0.0
        %652 = vmatprep.subr.mxu0 0.0
        %653 = vmatpush1.msra.mxu0 0.0
        %654 = vmatprep.subr.mxu0 0.0
        %655 = vmatpush1.msra.mxu0 0.0
        %656 = vmatprep.subr.mxu0 0.0
        %657 = vmatpush1.msra.mxu0 0.0
        %658 = vmatprep.subr.mxu0 0.0
        %659 = vmatpush1.msra.mxu0 0.0
        %660 = vmatprep.subr.mxu0 0.0
        %661 = vmatpush1.msra.mxu0 0.0
        %662 = vmatprep.subr.mxu0 0.0
        %663 = vmatpush1.msra.mxu0 0.0
        %664 = vmatprep.subr.mxu0 0.0
        %665 = vmatpush1.msra.mxu0 0.0
        %666 = vmatprep.subr.mxu0 0.0
        %667 = vmatpush1.msra.mxu0 0.0
        %668 = vmatprep.subr.mxu0 0.0
        %669 = vmatpush1.msra.mxu0 0.0
        %670 = vmatprep.subr.mxu0 0.0
        %671 = vmatpush1.msra.mxu0 0.0
        %672 = vmatprep.subr.mxu0 0.0
        %673 = vmatpush1.msra.mxu0 0.0
        %674 = vmatprep.subr.mxu0 0.0
        %675 = vmatpush1.msra.mxu0 0.0
        %676 = vmatprep.mubr.f32.mxu0 0.0
        %677 = vmatmul.mubr.f32.gmra.mrb[0].mxu0 %v605
        %v678 = vpop.f32.mrb[0].mxu0
        %v679 = vadd.f32 0.0, %v678
        %v680 = vpop.f32.mrb[0].mxu0
        %681 = vmatprep.mubr.f32.mxu0 0.0
        %682 = vmatmul.mubr.f32.gmra.mrb[0].mxu0 %v608
        %v683 = vpop.f32.mrb[0].mxu0
        %v684 = vadd.f32 0.0, %v683
        %v685 = vpop.f32.mrb[0].mxu0
        %686 = vdwg.mxu0
        %v687 = vadd.f32 %v310, %v679
        %v688 = vadd.f32 %v315, %v684
        %v689 = vld [vmem:[%s319] sm:$0xff]
        %v690 = vld [vmem:[%s319 + $0x8] sm:$0xff]
        %v691 = vld [vmem:[%s163 + $0x2] sm:$0x1]
        %v692 = vld [vmem:[%s163 + $0xa] sm:$0x1]
        %v693 = vld [vmem:[%s163 + $0x12] sm:$0x1]
        %v694 = vld [vmem:[%s163 + $0x1a] sm:$0x1]
        %v695 = vld [vmem:[%s163 + $0x22] sm:$0x1]
        %v696 = vld [vmem:[%s163 + $0x2a] sm:$0x1]
        %v703 = vrot.slane %v692, 7
        %v704 = vsel %vm208, %v703, %v691
        %v705 = vrot.slane %v693, 6
        %v706 = vsel %vm211, %v705, %v704
        %v707 = vrot.slane %v694, 5
        %v708 = vsel %vm214, %v707, %v706
        %v709 = vrot.slane %v695, 4
        %v710 = vsel %vm217, %v709, %v708
        %v711 = vrot.slane %v696, 3
        %v712 = vsel %vm220, %v711, %v710
        %v714 = vsel %vm222, %v689, 0
        %v717 = vsel %vm222, %v690, 0
        %v719 = vsel %vm229, %v712, 0
        %721 = vmatprep.subr.mxu0 0.0
        %722 = vmatpush1.msra.mxu0 %v719
        %723 = vmatprep.subr.mxu0 0.0
        %724 = vmatpush1.msra.mxu0 0.0
        %725 = vmatprep.subr.mxu0 0.0
        %726 = vmatpush1.msra.mxu0 0.0
        %727 = vmatprep.subr.mxu0 0.0
        %728 = vmatpush1.msra.mxu0 0.0
        %729 = vmatprep.subr.mxu0 0.0
        %730 = vmatpush1.msra.mxu0 0.0
        %731 = vmatprep.subr.mxu0 0.0
        %732 = vmatpush1.msra.mxu0 0.0
        %733 = vmatprep.subr.mxu0 0.0
        %734 = vmatpush1.msra.mxu0 0.0
        %735 = vmatprep.subr.mxu0 0.0
        %736 = vmatpush1.msra.mxu0 0.0
        %737 = vmatprep.subr.mxu0 0.0
        %738 = vmatpush1.msra.mxu0 0.0
        %739 = vmatprep.subr.mxu0 0.0
        %740 = vmatpush1.msra.mxu0 0.0
        %741 = vmatprep.subr.mxu0 0.0
        %742 = vmatpush1.msra.mxu0 0.0
        %743 = vmatprep.subr.mxu0 0.0
        %744 = vmatpush1.msra.mxu0 0.0
        %745 = vmatprep.subr.mxu0 0.0
        %746 = vmatpush1.msra.mxu0 0.0
        %747 = vmatprep.subr.mxu0 0.0
        %748 = vmatpush1.msra.mxu0 0.0
        %749 = vmatprep.subr.mxu0 0.0
        %750 = vmatpush1.msra.mxu0 0.0
        %751 = vmatprep.subr.mxu0 0.0
        %752 = vmatpush1.msra.mxu0 0.0
        %753 = vmatprep.subr.mxu0 0.0
        %754 = vmatpush1.msra.mxu0 0.0
        %755 = vmatprep.subr.mxu0 0.0
        %756 = vmatpush1.msra.mxu0 0.0
        %757 = vmatprep.subr.mxu0 0.0
        %758 = vmatpush1.msra.mxu0 0.0
        %759 = vmatprep.subr.mxu0 0.0
        %760 = vmatpush1.msra.mxu0 0.0
        %761 = vmatprep.subr.mxu0 0.0
        %762 = vmatpush1.msra.mxu0 0.0
        %763 = vmatprep.subr.mxu0 0.0
        %764 = vmatpush1.msra.mxu0 0.0
        %765 = vmatprep.subr.mxu0 0.0
        %766 = vmatpush1.msra.mxu0 0.0
        %767 = vmatprep.subr.mxu0 0.0
        %768 = vmatpush1.msra.mxu0 0.0
        %769 = vmatprep.subr.mxu0 0.0
        %770 = vmatpush1.msra.mxu0 0.0
        %771 = vmatprep.subr.mxu0 0.0
        %772 = vmatpush1.msra.mxu0 0.0
        %773 = vmatprep.subr.mxu0 0.0
        %774 = vmatpush1.msra.mxu0 0.0
        %775 = vmatprep.subr.mxu0 0.0
        %776 = vmatpush1.msra.mxu0 0.0
        %777 = vmatprep.subr.mxu0 0.0
        %778 = vmatpush1.msra.mxu0 0.0
        %779 = vmatprep.subr.mxu0 0.0
        %780 = vmatpush1.msra.mxu0 0.0
        %781 = vmatprep.subr.mxu0 0.0
        %782 = vmatpush1.msra.mxu0 0.0
        %783 = vmatprep.subr.mxu0 0.0
        %784 = vmatpush1.msra.mxu0 0.0
        %785 = vmatprep.mubr.f32.mxu0 0.0
        %786 = vmatmul.mubr.f32.gmra.mrb[0].mxu0 %v714
        %v787 = vpop.f32.mrb[0].mxu0
        %v788 = vadd.f32 0.0, %v787
        %v789 = vpop.f32.mrb[0].mxu0
        %790 = vmatprep.mubr.f32.mxu0 0.0
        %791 = vmatmul.mubr.f32.gmra.mrb[0].mxu0 %v717
        %v792 = vpop.f32.mrb[0].mxu0
        %v793 = vadd.f32 0.0, %v792
        %v794 = vpop.f32.mrb[0].mxu0
        %795 = vdwg.mxu0
        %v796 = vadd.f32 %v687, %v788
        %v797 = vadd.f32 %v688, %v793
        %v798 = vld [vmem:[%s429] sm:$0xff]
        %v799 = vld [vmem:[%s429 + $0x8] sm:$0xff]
        %v800 = vld [vmem:[%s163 + $0x3] sm:$0x1]
        %v801 = vld [vmem:[%s163 + $0xb] sm:$0x1]
        %v802 = vld [vmem:[%s163 + $0x13] sm:$0x1]
        %v803 = vld [vmem:[%s163 + $0x1b] sm:$0x1]
        %v804 = vld [vmem:[%s163 + $0x23] sm:$0x1]
        %v805 = vld [vmem:[%s163 + $0x2b] sm:$0x1]
        %v812 = vrot.slane %v801, 7
        %v813 = vsel %vm208, %v812, %v800
        %v814 = vrot.slane %v802, 6
        %v815 = vsel %vm211, %v814, %v813
        %v816 = vrot.slane %v803, 5
        %v817 = vsel %vm214, %v816, %v815
        %v818 = vrot.slane %v804, 4
        %v819 = vsel %vm217, %v818, %v817
        %v820 = vrot.slane %v805, 3
        %v821 = vsel %vm220, %v820, %v819
        %v823 = vsel %vm222, %v798, 0
        %v826 = vsel %vm222, %v799, 0
        %v828 = vsel %vm229, %v821, 0
        %830 = vmatprep.subr.mxu0 0.0
        %831 = vmatpush1.msra.mxu0 %v828
        %832 = vmatprep.subr.mxu0 0.0
        %833 = vmatpush1.msra.mxu0 0.0
        %834 = vmatprep.subr.mxu0 0.0
        %835 = vmatpush1.msra.mxu0 0.0
        %836 = vmatprep.subr.mxu0 0.0
        %837 = vmatpush1.msra.mxu0 0.0
        %838 = vmatprep.subr.mxu0 0.0
        %839 = vmatpush1.msra.mxu0 0.0
        %840 = vmatprep.subr.mxu0 0.0
        %841 = vmatpush1.msra.mxu0 0.0
        %842 = vmatprep.subr.mxu0 0.0
        %843 = vmatpush1.msra.mxu0 0.0
        %844 = vmatprep.subr.mxu0 0.0
        %845 = vmatpush1.msra.mxu0 0.0
        %846 = vmatprep.subr.mxu0 0.0
        %847 = vmatpush1.msra.mxu0 0.0
        %848 = vmatprep.subr.mxu0 0.0
        %849 = vmatpush1.msra.mxu0 0.0
        %850 = vmatprep.subr.mxu0 0.0
        %851 = vmatpush1.msra.mxu0 0.0
        %852 = vmatprep.subr.mxu0 0.0
        %853 = vmatpush1.msra.mxu0 0.0
        %854 = vmatprep.subr.mxu0 0.0
        %855 = vmatpush1.msra.mxu0 0.0
        %856 = vmatprep.subr.mxu0 0.0
        %857 = vmatpush1.msra.mxu0 0.0
        %858 = vmatprep.subr.mxu0 0.0
        %859 = vmatpush1.msra.mxu0 0.0
        %860 = vmatprep.subr.mxu0 0.0
        %861 = vmatpush1.msra.mxu0 0.0
        %862 = vmatprep.subr.mxu0 0.0
        %863 = vmatpush1.msra.mxu0 0.0
        %864 = vmatprep.subr.mxu0 0.0
        %865 = vmatpush1.msra.mxu0 0.0
        %866 = vmatprep.subr.mxu0 0.0
        %867 = vmatpush1.msra.mxu0 0.0
        %868 = vmatprep.subr.mxu0 0.0
        %869 = vmatpush1.msra.mxu0 0.0
        %870 = vmatprep.subr.mxu0 0.0
        %871 = vmatpush1.msra.mxu0 0.0
        %872 = vmatprep.subr.mxu0 0.0
        %873 = vmatpush1.msra.mxu0 0.0
        %874 = vmatprep.subr.mxu0 0.0
        %875 = vmatpush1.msra.mxu0 0.0
        %876 = vmatprep.subr.mxu0 0.0
        %877 = vmatpush1.msra.mxu0 0.0
        %878 = vmatprep.subr.mxu0 0.0
        %879 = vmatpush1.msra.mxu0 0.0
        %880 = vmatprep.subr.mxu0 0.0
        %881 = vmatpush1.msra.mxu0 0.0
        %882 = vmatprep.subr.mxu0 0.0
        %883 = vmatpush1.msra.mxu0 0.0
        %884 = vmatprep.subr.mxu0 0.0
        %885 = vmatpush1.msra.mxu0 0.0
        %886 = vmatprep.subr.mxu0 0.0
        %887 = vmatpush1.msra.mxu0 0.0
        %888 = vmatprep.subr.mxu0 0.0
        %889 = vmatpush1.msra.mxu0 0.0
        %890 = vmatprep.subr.mxu0 0.0
        %891 = vmatpush1.msra.mxu0 0.0
        %892 = vmatprep.subr.mxu0 0.0
        %893 = vmatpush1.msra.mxu0 0.0
        %894 = vmatprep.mubr.f32.mxu0 0.0
        %895 = vmatmul.mubr.f32.gmra.mrb[0].mxu0 %v823
        %v896 = vpop.f32.mrb[0].mxu0
        %v897 = vadd.f32 0.0, %v896
        %v898 = vpop.f32.mrb[0].mxu0
        %899 = vmatprep.mubr.f32.mxu0 0.0
        %900 = vmatmul.mubr.f32.gmra.mrb[0].mxu0 %v826
        %v901 = vpop.f32.mrb[0].mxu0
        %v902 = vadd.f32 0.0, %v901
        %v903 = vpop.f32.mrb[0].mxu0
        %904 = vdwg.mxu0
        %v905 = vadd.f32 %v796, %v897
        %v906 = vadd.f32 %v797, %v902
        %v907 = vxor.u32 %v906, 2147483648
        %v908 = vmul.f32 %v907, 1.442695
        %v909 = vpow.pop %v908
        %v910 = vadd.f32 %v909, 1.0
        %v911 = vrcp.pop %v910
        %v912 = vmul.f32 1.0, %v911
        %v913 = vmul.f32 %v905, %v912
        %v916 = vunpack.c.l.s4 1966171168
        %v917 = vunpack.c.0.s8 %v916
        %v918 = vlaneseq
        %v919 = vshrl.u32 %v918, 7
        %v920 = vsub.s32 %v917, %v919
        %v921 = vrot.slane %v913, %v920
        %v922 = vcombine.high %v921, %v921
        %v924 = vunpack.c.l.s4 1966171168
        %v925 = vunpack.c.0.s8 %v924
        %v926 = vlaneseq
        %v927 = vshrl.u32 %v926, 7
        %v928 = vsub.s32 %v925, %v927
        %v929 = vrot.slane %v921, %v928
        %v931 = vunpack.c.l.s4 1966171168
        %v932 = vunpack.c.0.s8 %v931
        %v933 = vlaneseq
        %v934 = vshrl.u32 %v933, 7
        %v935 = vsub.s32 %v932, %v934
        %v936 = vrot.slane %v922, %v935
        %v937 = vcombine.high %v929, %v929
        %v938 = vcombine.high %v936, %v936
        %943 = vst.msk [vmem:[%s190 + $0x1] sm:$0x1] %vm575, %v929
        %944 = vst.msk [vmem:[%s190 + $0x9] sm:$0x1] %vm575, %v936
        %945 = vst.msk [vmem:[%s190 + $0x11] sm:$0x1] %vm575, %v937
        %946 = vst.msk [vmem:[%s190 + $0x19] sm:$0x1] %vm575, %v938
        %v947 = vld [vmem:[%s1] sm:$0xff]
        %v948 = vld [vmem:[%s1 + $0x8] sm:$0xff]
        %v949 = vld [vmem:[%s163 + $0x2] sm:$0x1]
        %v950 = vld [vmem:[%s163 + $0xa] sm:$0x1]
        %v951 = vld [vmem:[%s163 + $0x12] sm:$0x1]
        %v952 = vld [vmem:[%s163 + $0x1a] sm:$0x1]
        %v953 = vld [vmem:[%s163 + $0x22] sm:$0x1]
        %v954 = vld [vmem:[%s163 + $0x2a] sm:$0x1]
        %v961 = vrot.slane %v950, 7
        %v962 = vsel %vm208, %v961, %v949
        %v963 = vrot.slane %v951, 6
        %v964 = vsel %vm211, %v963, %v962
        %v965 = vrot.slane %v952, 5
        %v966 = vsel %vm214, %v965, %v964
        %v967 = vrot.slane %v953, 4
        %v968 = vsel %vm217, %v967, %v966
        %v969 = vrot.slane %v954, 3
        %v970 = vsel %vm220, %v969, %v968
        %v972 = vsel %vm222, %v947, 0
        %v975 = vsel %vm222, %v948, 0
        %v977 = vsel %vm229, %v970, 0
        %979 = vmatprep.subr.mxu0 0.0
        %980 = vmatpush1.msra.mxu0 %v977
        %981 = vmatprep.subr.mxu0 0.0
        %982 = vmatpush1.msra.mxu0 0.0
        %983 = vmatprep.subr.mxu0 0.0
        %984 = vmatpush1.msra.mxu0 0.0
        %985 = vmatprep.subr.mxu0 0.0
        %986 = vmatpush1.msra.mxu0 0.0
        %987 = vmatprep.subr.mxu0 0.0
        %988 = vmatpush1.msra.mxu0 0.0
        %989 = vmatprep.subr.mxu0 0.0
        %990 = vmatpush1.msra.mxu0 0.0
        %991 = vmatprep.subr.mxu0 0.0
        %992 = vmatpush1.msra.mxu0 0.0
        %993 = vmatprep.subr.mxu0 0.0
        %994 = vmatpush1.msra.mxu0 0.0
        %995 = vmatprep.subr.mxu0 0.0
        %996 = vmatpush1.msra.mxu0 0.0
        %997 = vmatprep.subr.mxu0 0.0
        %998 = vmatpush1.msra.mxu0 0.0
        %999 = vmatprep.subr.mxu0 0.0
        %1000 = vmatpush1.msra.mxu0 0.0
        %1001 = vmatprep.subr.mxu0 0.0
        %1002 = vmatpush1.msra.mxu0 0.0
        %1003 = vmatprep.subr.mxu0 0.0
        %1004 = vmatpush1.msra.mxu0 0.0
        %1005 = vmatprep.subr.mxu0 0.0
        %1006 = vmatpush1.msra.mxu0 0.0
        %1007 = vmatprep.subr.mxu0 0.0
        %1008 = vmatpush1.msra.mxu0 0.0
        %1009 = vmatprep.subr.mxu0 0.0
        %1010 = vmatpush1.msra.mxu0 0.0
        %1011 = vmatprep.subr.mxu0 0.0
        %1012 = vmatpush1.msra.mxu0 0.0
        %1013 = vmatprep.subr.mxu0 0.0
        %1014 = vmatpush1.msra.mxu0 0.0
        %1015 = vmatprep.subr.mxu0 0.0
        %1016 = vmatpush1.msra.mxu0 0.0
        %1017 = vmatprep.subr.mxu0 0.0
        %1018 = vmatpush1.msra.mxu0 0.0
        %1019 = vmatprep.subr.mxu0 0.0
        %1020 = vmatpush1.msra.mxu0 0.0
        %1021 = vmatprep.subr.mxu0 0.0
        %1022 = vmatpush1.msra.mxu0 0.0
        %1023 = vmatprep.subr.mxu0 0.0
        %1024 = vmatpush1.msra.mxu0 0.0
        %1025 = vmatprep.subr.mxu0 0.0
        %1026 = vmatpush1.msra.mxu0 0.0
        %1027 = vmatprep.subr.mxu0 0.0
        %1028 = vmatpush1.msra.mxu0 0.0
        %1029 = vmatprep.subr.mxu0 0.0
        %1030 = vmatpush1.msra.mxu0 0.0
        %1031 = vmatprep.subr.mxu0 0.0
        %1032 = vmatpush1.msra.mxu0 0.0
        %1033 = vmatprep.subr.mxu0 0.0
        %1034 = vmatpush1.msra.mxu0 0.0
        %1035 = vmatprep.subr.mxu0 0.0
        %1036 = vmatpush1.msra.mxu0 0.0
        %1037 = vmatprep.subr.mxu0 0.0
        %1038 = vmatpush1.msra.mxu0 0.0
        %1039 = vmatprep.subr.mxu0 0.0
        %1040 = vmatpush1.msra.mxu0 0.0
        %1041 = vmatprep.subr.mxu0 0.0
        %1042 = vmatpush1.msra.mxu0 0.0
        %1043 = vmatprep.mubr.f32.mxu0 0.0
        %1044 = vmatmul.mubr.f32.gmra.mrb[0].mxu0 %v972
        %v1045 = vpop.f32.mrb[0].mxu0
        %v1046 = vadd.f32 0.0, %v1045
        %v1047 = vpop.f32.mrb[0].mxu0
        %1048 = vmatprep.mubr.f32.mxu0 0.0
        %1049 = vmatmul.mubr.f32.gmra.mrb[0].mxu0 %v975
        %v1050 = vpop.f32.mrb[0].mxu0
        %v1051 = vadd.f32 0.0, %v1050
        %v1052 = vpop.f32.mrb[0].mxu0
        %1053 = vdwg.mxu0
        %v1054 = vadd.f32 %v310, %v1046
        %v1055 = vadd.f32 %v315, %v1051
        %v1056 = vld [vmem:[%s319] sm:$0xff]
        %v1057 = vld [vmem:[%s319 + $0x8] sm:$0xff]
        %v1058 = vld [vmem:[%s163 + $0x3] sm:$0x1]
        %v1059 = vld [vmem:[%s163 + $0xb] sm:$0x1]
        %v1060 = vld [vmem:[%s163 + $0x13] sm:$0x1]
        %v1061 = vld [vmem:[%s163 + $0x1b] sm:$0x1]
        %v1062 = vld [vmem:[%s163 + $0x23] sm:$0x1]
        %v1063 = vld [vmem:[%s163 + $0x2b] sm:$0x1]
        %v1070 = vrot.slane %v1059, 7
        %v1071 = vsel %vm208, %v1070, %v1058
        %v1072 = vrot.slane %v1060, 6
        %v1073 = vsel %vm211, %v1072, %v1071
        %v1074 = vrot.slane %v1061, 5
        %v1075 = vsel %vm214, %v1074, %v1073
        %v1076 = vrot.slane %v1062, 4
        %v1077 = vsel %vm217, %v1076, %v1075
        %v1078 = vrot.slane %v1063, 3
        %v1079 = vsel %vm220, %v1078, %v1077
        %v1081 = vsel %vm222, %v1056, 0
        %v1084 = vsel %vm222, %v1057, 0
        %v1086 = vsel %vm229, %v1079, 0
        %1088 = vmatprep.subr.mxu0 0.0
        %1089 = vmatpush1.msra.mxu0 %v1086
        %1090 = vmatprep.subr.mxu0 0.0
        %1091 = vmatpush1.msra.mxu0 0.0
        %1092 = vmatprep.subr.mxu0 0.0
        %1093 = vmatpush1.msra.mxu0 0.0
        %1094 = vmatprep.subr.mxu0 0.0
        %1095 = vmatpush1.msra.mxu0 0.0
        %1096 = vmatprep.subr.mxu0 0.0
        %1097 = vmatpush1.msra.mxu0 0.0
        %1098 = vmatprep.subr.mxu0 0.0
        %1099 = vmatpush1.msra.mxu0 0.0
        %1100 = vmatprep.subr.mxu0 0.0
        %1101 = vmatpush1.msra.mxu0 0.0
        %1102 = vmatprep.subr.mxu0 0.0
        %1103 = vmatpush1.msra.mxu0 0.0
        %1104 = vmatprep.subr.mxu0 0.0
        %1105 = vmatpush1.msra.mxu0 0.0
        %1106 = vmatprep.subr.mxu0 0.0
        %1107 = vmatpush1.msra.mxu0 0.0
        %1108 = vmatprep.subr.mxu0 0.0
        %1109 = vmatpush1.msra.mxu0 0.0
        %1110 = vmatprep.subr.mxu0 0.0
        %1111 = vmatpush1.msra.mxu0 0.0
        %1112 = vmatprep.subr.mxu0 0.0
        %1113 = vmatpush1.msra.mxu0 0.0
        %1114 = vmatprep.subr.mxu0 0.0
        %1115 = vmatpush1.msra.mxu0 0.0
        %1116 = vmatprep.subr.mxu0 0.0
        %1117 = vmatpush1.msra.mxu0 0.0
        %1118 = vmatprep.subr.mxu0 0.0
        %1119 = vmatpush1.msra.mxu0 0.0
        %1120 = vmatprep.subr.mxu0 0.0
        %1121 = vmatpush1.msra.mxu0 0.0
        %1122 = vmatprep.subr.mxu0 0.0
        %1123 = vmatpush1.msra.mxu0 0.0
        %1124 = vmatprep.subr.mxu0 0.0
        %1125 = vmatpush1.msra.mxu0 0.0
        %1126 = vmatprep.subr.mxu0 0.0
        %1127 = vmatpush1.msra.mxu0 0.0
        %1128 = vmatprep.subr.mxu0 0.0
        %1129 = vmatpush1.msra.mxu0 0.0
        %1130 = vmatprep.subr.mxu0 0.0
        %1131 = vmatpush1.msra.mxu0 0.0
        %1132 = vmatprep.subr.mxu0 0.0
        %1133 = vmatpush1.msra.mxu0 0.0
        %1134 = vmatprep.subr.mxu0 0.0
        %1135 = vmatpush1.msra.mxu0 0.0
        %1136 = vmatprep.subr.mxu0 0.0
        %1137 = vmatpush1.msra.mxu0 0.0
        %1138 = vmatprep.subr.mxu0 0.0
        %1139 = vmatpush1.msra.mxu0 0.0
        %1140 = vmatprep.subr.mxu0 0.0
        %1141 = vmatpush1.msra.mxu0 0.0
        %1142 = vmatprep.subr.mxu0 0.0
        %1143 = vmatpush1.msra.mxu0 0.0
        %1144 = vmatprep.subr.mxu0 0.0
        %1145 = vmatpush1.msra.mxu0 0.0
        %1146 = vmatprep.subr.mxu0 0.0
        %1147 = vmatpush1.msra.mxu0 0.0
        %1148 = vmatprep.subr.mxu0 0.0
        %1149 = vmatpush1.msra.mxu0 0.0
        %1150 = vmatprep.subr.mxu0 0.0
        %1151 = vmatpush1.msra.mxu0 0.0
        %1152 = vmatprep.mubr.f32.mxu0 0.0
        %1153 = vmatmul.mubr.f32.gmra.mrb[0].mxu0 %v1081
        %v1154 = vpop.f32.mrb[0].mxu0
        %v1155 = vadd.f32 0.0, %v1154
        %v1156 = vpop.f32.mrb[0].mxu0
        %1157 = vmatprep.mubr.f32.mxu0 0.0
        %1158 = vmatmul.mubr.f32.gmra.mrb[0].mxu0 %v1084
        %v1159 = vpop.f32.mrb[0].mxu0
        %v1160 = vadd.f32 0.0, %v1159
        %v1161 = vpop.f32.mrb[0].mxu0
        %1162 = vdwg.mxu0
        %v1163 = vadd.f32 %v1054, %v1155
        %v1164 = vadd.f32 %v1055, %v1160
        %v1165 = vld [vmem:[%s429] sm:$0xff]
        %v1166 = vld [vmem:[%s429 + $0x8] sm:$0xff]
        %v1167 = vld [vmem:[%s163 + $0x4] sm:$0x1]
        %v1168 = vld [vmem:[%s163 + $0xc] sm:$0x1]
        %v1169 = vld [vmem:[%s163 + $0x14] sm:$0x1]
        %v1170 = vld [vmem:[%s163 + $0x1c] sm:$0x1]
        %v1171 = vld [vmem:[%s163 + $0x24] sm:$0x1]
        %v1172 = vld [vmem:[%s163 + $0x2c] sm:$0x1]
        %v1179 = vrot.slane %v1168, 7
        %v1180 = vsel %vm208, %v1179, %v1167
        %v1181 = vrot.slane %v1169, 6
        %v1182 = vsel %vm211, %v1181, %v1180
        %v1183 = vrot.slane %v1170, 5
        %v1184 = vsel %vm214, %v1183, %v1182
        %v1185 = vrot.slane %v1171, 4
        %v1186 = vsel %vm217, %v1185, %v1184
        %v1187 = vrot.slane %v1172, 3
        %v1188 = vsel %vm220, %v1187, %v1186
        %v1190 = vsel %vm222, %v1165, 0
        %v1193 = vsel %vm222, %v1166, 0
        %v1195 = vsel %vm229, %v1188, 0
        %1197 = vmatprep.subr.mxu0 0.0
        %1198 = vmatpush1.msra.mxu0 %v1195
        %1199 = vmatprep.subr.mxu0 0.0
        %1200 = vmatpush1.msra.mxu0 0.0
        %1201 = vmatprep.subr.mxu0 0.0
        %1202 = vmatpush1.msra.mxu0 0.0
        %1203 = vmatprep.subr.mxu0 0.0
        %1204 = vmatpush1.msra.mxu0 0.0
        %1205 = vmatprep.subr.mxu0 0.0
        %1206 = vmatpush1.msra.mxu0 0.0
        %1207 = vmatprep.subr.mxu0 0.0
        %1208 = vmatpush1.msra.mxu0 0.0
        %1209 = vmatprep.subr.mxu0 0.0
        %1210 = vmatpush1.msra.mxu0 0.0
        %1211 = vmatprep.subr.mxu0 0.0
        %1212 = vmatpush1.msra.mxu0 0.0
        %1213 = vmatprep.subr.mxu0 0.0
        %1214 = vmatpush1.msra.mxu0 0.0
        %1215 = vmatprep.subr.mxu0 0.0
        %1216 = vmatpush1.msra.mxu0 0.0
        %1217 = vmatprep.subr.mxu0 0.0
        %1218 = vmatpush1.msra.mxu0 0.0
        %1219 = vmatprep.subr.mxu0 0.0
        %1220 = vmatpush1.msra.mxu0 0.0
        %1221 = vmatprep.subr.mxu0 0.0
        %1222 = vmatpush1.msra.mxu0 0.0
        %1223 = vmatprep.subr.mxu0 0.0
        %1224 = vmatpush1.msra.mxu0 0.0
        %1225 = vmatprep.subr.mxu0 0.0
        %1226 = vmatpush1.msra.mxu0 0.0
        %1227 = vmatprep.subr.mxu0 0.0
        %1228 = vmatpush1.msra.mxu0 0.0
        %1229 = vmatprep.subr.mxu0 0.0
        %1230 = vmatpush1.msra.mxu0 0.0
        %1231 = vmatprep.subr.mxu0 0.0
        %1232 = vmatpush1.msra.mxu0 0.0
        %1233 = vmatprep.subr.mxu0 0.0
        %1234 = vmatpush1.msra.mxu0 0.0
        %1235 = vmatprep.subr.mxu0 0.0
        %1236 = vmatpush1.msra.mxu0 0.0
        %1237 = vmatprep.subr.mxu0 0.0
        %1238 = vmatpush1.msra.mxu0 0.0
        %1239 = vmatprep.subr.mxu0 0.0
        %1240 = vmatpush1.msra.mxu0 0.0
        %1241 = vmatprep.subr.mxu0 0.0
        %1242 = vmatpush1.msra.mxu0 0.0
        %1243 = vmatprep.subr.mxu0 0.0
        %1244 = vmatpush1.msra.mxu0 0.0
        %1245 = vmatprep.subr.mxu0 0.0
        %1246 = vmatpush1.msra.mxu0 0.0
        %1247 = vmatprep.subr.mxu0 0.0
        %1248 = vmatpush1.msra.mxu0 0.0
        %1249 = vmatprep.subr.mxu0 0.0
        %1250 = vmatpush1.msra.mxu0 0.0
        %1251 = vmatprep.subr.mxu0 0.0
        %1252 = vmatpush1.msra.mxu0 0.0
        %1253 = vmatprep.subr.mxu0 0.0
        %1254 = vmatpush1.msra.mxu0 0.0
        %1255 = vmatprep.subr.mxu0 0.0
        %1256 = vmatpush1.msra.mxu0 0.0
        %1257 = vmatprep.subr.mxu0 0.0
        %1258 = vmatpush1.msra.mxu0 0.0
        %1259 = vmatprep.subr.mxu0 0.0
        %1260 = vmatpush1.msra.mxu0 0.0
        %1261 = vmatprep.mubr.f32.mxu0 0.0
        %1262 = vmatmul.mubr.f32.gmra.mrb[0].mxu0 %v1190
        %v1263 = vpop.f32.mrb[0].mxu0
        %v1264 = vadd.f32 0.0, %v1263
        %v1265 = vpop.f32.mrb[0].mxu0
        %1266 = vmatprep.mubr.f32.mxu0 0.0
        %1267 = vmatmul.mubr.f32.gmra.mrb[0].mxu0 %v1193
        %v1268 = vpop.f32.mrb[0].mxu0
        %v1269 = vadd.f32 0.0, %v1268
        %v1270 = vpop.f32.mrb[0].mxu0
        %1271 = vdwg.mxu0
        %v1272 = vadd.f32 %v1163, %v1264
        %v1273 = vadd.f32 %v1164, %v1269
        %v1274 = vxor.u32 %v1273, 2147483648
        %v1275 = vmul.f32 %v1274, 1.442695
        %v1276 = vpow.pop %v1275
        %v1277 = vadd.f32 %v1276, 1.0
        %v1278 = vrcp.pop %v1277
        %v1279 = vmul.f32 1.0, %v1278
        %v1280 = vmul.f32 %v1272, %v1279
        %v1283 = vunpack.c.l.s4 1966171168
        %v1284 = vunpack.c.0.s8 %v1283
        %v1285 = vlaneseq
        %v1286 = vshrl.u32 %v1285, 7
        %v1287 = vsub.s32 %v1284, %v1286
        %v1288 = vrot.slane %v1280, %v1287
        %v1289 = vcombine.high %v1288, %v1288
        %v1291 = vunpack.c.l.s4 1966171168
        %v1292 = vunpack.c.0.s8 %v1291
        %v1293 = vlaneseq
        %v1294 = vshrl.u32 %v1293, 7
        %v1295 = vsub.s32 %v1292, %v1294
        %v1296 = vrot.slane %v1288, %v1295
        %v1298 = vunpack.c.l.s4 1966171168
        %v1299 = vunpack.c.0.s8 %v1298
        %v1300 = vlaneseq
        %v1301 = vshrl.u32 %v1300, 7
        %v1302 = vsub.s32 %v1299, %v1301
        %v1303 = vrot.slane %v1289, %v1302
        %v1304 = vcombine.high %v1296, %v1296
        %v1305 = vcombine.high %v1303, %v1303
        %1310 = vst.msk [vmem:[%s190 + $0x2] sm:$0x1] %vm575, %v1296
        %1311 = vst.msk [vmem:[%s190 + $0xa] sm:$0x1] %vm575, %v1303
        %1312 = vst.msk [vmem:[%s190 + $0x12] sm:$0x1] %vm575, %v1304
        %1313 = vst.msk [vmem:[%s190 + $0x1a] sm:$0x1] %vm575, %v1305
        %v1314 = vld [vmem:[%s1] sm:$0xff]
        %v1315 = vld [vmem:[%s1 + $0x8] sm:$0xff]
        %v1316 = vld [vmem:[%s163 + $0x3] sm:$0x1]
        %v1317 = vld [vmem:[%s163 + $0xb] sm:$0x1]
        %v1318 = vld [vmem:[%s163 + $0x13] sm:$0x1]
        %v1319 = vld [vmem:[%s163 + $0x1b] sm:$0x1]
        %v1320 = vld [vmem:[%s163 + $0x23] sm:$0x1]
        %v1321 = vld [vmem:[%s163 + $0x2b] sm:$0x1]
        %v1328 = vrot.slane %v1317, 7
        %v1329 = vsel %vm208, %v1328, %v1316
        %v1330 = vrot.slane %v1318, 6
        %v1331 = vsel %vm211, %v1330, %v1329
        %v1332 = vrot.slane %v1319, 5
        %v1333 = vsel %vm214, %v1332, %v1331
        %v1334 = vrot.slane %v1320, 4
        %v1335 = vsel %vm217, %v1334, %v1333
        %v1336 = vrot.slane %v1321, 3
        %v1337 = vsel %vm220, %v1336, %v1335
        %v1339 = vsel %vm222, %v1314, 0
        %v1342 = vsel %vm222, %v1315, 0
        %v1344 = vsel %vm229, %v1337, 0
        %1346 = vmatprep.subr.mxu0 0.0
        %1347 = vmatpush1.msra.mxu0 %v1344
        %1348 = vmatprep.subr.mxu0 0.0
        %1349 = vmatpush1.msra.mxu0 0.0
        %1350 = vmatprep.subr.mxu0 0.0
        %1351 = vmatpush1.msra.mxu0 0.0
        %1352 = vmatprep.subr.mxu0 0.0
        %1353 = vmatpush1.msra.mxu0 0.0
        %1354 = vmatprep.subr.mxu0 0.0
        %1355 = vmatpush1.msra.mxu0 0.0
        %1356 = vmatprep.subr.mxu0 0.0
        %1357 = vmatpush1.msra.mxu0 0.0
        %1358 = vmatprep.subr.mxu0 0.0
        %1359 = vmatpush1.msra.mxu0 0.0
        %1360 = vmatprep.subr.mxu0 0.0
        %1361 = vmatpush1.msra.mxu0 0.0
        %1362 = vmatprep.subr.mxu0 0.0
        %1363 = vmatpush1.msra.mxu0 0.0
        %1364 = vmatprep.subr.mxu0 0.0
        %1365 = vmatpush1.msra.mxu0 0.0
        %1366 = vmatprep.subr.mxu0 0.0
        %1367 = vmatpush1.msra.mxu0 0.0
        %1368 = vmatprep.subr.mxu0 0.0
        %1369 = vmatpush1.msra.mxu0 0.0
        %1370 = vmatprep.subr.mxu0 0.0
        %1371 = vmatpush1.msra.mxu0 0.0
        %1372 = vmatprep.subr.mxu0 0.0
        %1373 = vmatpush1.msra.mxu0 0.0
        %1374 = vmatprep.subr.mxu0 0.0
        %1375 = vmatpush1.msra.mxu0 0.0
        %1376 = vmatprep.subr.mxu0 0.0
        %1377 = vmatpush1.msra.mxu0 0.0
        %1378 = vmatprep.subr.mxu0 0.0
        %1379 = vmatpush1.msra.mxu0 0.0
        %1380 = vmatprep.subr.mxu0 0.0
        %1381 = vmatpush1.msra.mxu0 0.0
        %1382 = vmatprep.subr.mxu0 0.0
        %1383 = vmatpush1.msra.mxu0 0.0
        %1384 = vmatprep.subr.mxu0 0.0
        %1385 = vmatpush1.msra.mxu0 0.0
        %1386 = vmatprep.subr.mxu0 0.0
        %1387 = vmatpush1.msra.mxu0 0.0
        %1388 = vmatprep.subr.mxu0 0.0
        %1389 = vmatpush1.msra.mxu0 0.0
        %1390 = vmatprep.subr.mxu0 0.0
        %1391 = vmatpush1.msra.mxu0 0.0
        %1392 = vmatprep.subr.mxu0 0.0
        %1393 = vmatpush1.msra.mxu0 0.0
        %1394 = vmatprep.subr.mxu0 0.0
        %1395 = vmatpush1.msra.mxu0 0.0
        %1396 = vmatprep.subr.mxu0 0.0
        %1397 = vmatpush1.msra.mxu0 0.0
        %1398 = vmatprep.subr.mxu0 0.0
        %1399 = vmatpush1.msra.mxu0 0.0
        %1400 = vmatprep.subr.mxu0 0.0
        %1401 = vmatpush1.msra.mxu0 0.0
        %1402 = vmatprep.subr.mxu0 0.0
        %1403 = vmatpush1.msra.mxu0 0.0
        %1404 = vmatprep.subr.mxu0 0.0
        %1405 = vmatpush1.msra.mxu0 0.0
        %1406 = vmatprep.subr.mxu0 0.0
        %1407 = vmatpush1.msra.mxu0 0.0
        %1408 = vmatprep.subr.mxu0 0.0
        %1409 = vmatpush1.msra.mxu0 0.0
        %1410 = vmatprep.mubr.f32.mxu0 0.0
        %1411 = vmatmul.mubr.f32.gmra.mrb[0].mxu0 %v1339
        %v1412 = vpop.f32.mrb[0].mxu0
        %v1413 = vadd.f32 0.0, %v1412
        %v1414 = vpop.f32.mrb[0].mxu0
        %1415 = vmatprep.mubr.f32.mxu0 0.0
        %1416 = vmatmul.mubr.f32.gmra.mrb[0].mxu0 %v1342
        %v1417 = vpop.f32.mrb[0].mxu0
        %v1418 = vadd.f32 0.0, %v1417
        %v1419 = vpop.f32.mrb[0].mxu0
        %1420 = vdwg.mxu0
        %v1421 = vadd.f32 %v310, %v1413
        %v1422 = vadd.f32 %v315, %v1418
        %v1423 = vld [vmem:[%s319] sm:$0xff]
        %v1424 = vld [vmem:[%s319 + $0x8] sm:$0xff]
        %v1425 = vld [vmem:[%s163 + $0x4] sm:$0x1]
        %v1426 = vld [vmem:[%s163 + $0xc] sm:$0x1]
        %v1427 = vld [vmem:[%s163 + $0x14] sm:$0x1]
        %v1428 = vld [vmem:[%s163 + $0x1c] sm:$0x1]
        %v1429 = vld [vmem:[%s163 + $0x24] sm:$0x1]
        %v1430 = vld [vmem:[%s163 + $0x2c] sm:$0x1]
        %v1437 = vrot.slane %v1426, 7
        %v1438 = vsel %vm208, %v1437, %v1425
        %v1439 = vrot.slane %v1427, 6
        %v1440 = vsel %vm211, %v1439, %v1438
        %v1441 = vrot.slane %v1428, 5
        %v1442 = vsel %vm214, %v1441, %v1440
        %v1443 = vrot.slane %v1429, 4
        %v1444 = vsel %vm217, %v1443, %v1442
        %v1445 = vrot.slane %v1430, 3
        %v1446 = vsel %vm220, %v1445, %v1444
        %v1448 = vsel %vm222, %v1423, 0
        %v1451 = vsel %vm222, %v1424, 0
        %v1453 = vsel %vm229, %v1446, 0
        %1455 = vmatprep.subr.mxu0 0.0
        %1456 = vmatpush1.msra.mxu0 %v1453
        %1457 = vmatprep.subr.mxu0 0.0
        %1458 = vmatpush1.msra.mxu0 0.0
        %1459 = vmatprep.subr.mxu0 0.0
        %1460 = vmatpush1.msra.mxu0 0.0
        %1461 = vmatprep.subr.mxu0 0.0
        %1462 = vmatpush1.msra.mxu0 0.0
        %1463 = vmatprep.subr.mxu0 0.0
        %1464 = vmatpush1.msra.mxu0 0.0
        %1465 = vmatprep.subr.mxu0 0.0
        %1466 = vmatpush1.msra.mxu0 0.0
        %1467 = vmatprep.subr.mxu0 0.0
        %1468 = vmatpush1.msra.mxu0 0.0
        %1469 = vmatprep.subr.mxu0 0.0
        %1470 = vmatpush1.msra.mxu0 0.0
        %1471 = vmatprep.subr.mxu0 0.0
        %1472 = vmatpush1.msra.mxu0 0.0
        %1473 = vmatprep.subr.mxu0 0.0
        %1474 = vmatpush1.msra.mxu0 0.0
        %1475 = vmatprep.subr.mxu0 0.0
        %1476 = vmatpush1.msra.mxu0 0.0
        %1477 = vmatprep.subr.mxu0 0.0
        %1478 = vmatpush1.msra.mxu0 0.0
        %1479 = vmatprep.subr.mxu0 0.0
        %1480 = vmatpush1.msra.mxu0 0.0
        %1481 = vmatprep.subr.mxu0 0.0
        %1482 = vmatpush1.msra.mxu0 0.0
        %1483 = vmatprep.subr.mxu0 0.0
        %1484 = vmatpush1.msra.mxu0 0.0
        %1485 = vmatprep.subr.mxu0 0.0
        %1486 = vmatpush1.msra.mxu0 0.0
        %1487 = vmatprep.subr.mxu0 0.0
        %1488 = vmatpush1.msra.mxu0 0.0
        %1489 = vmatprep.subr.mxu0 0.0
        %1490 = vmatpush1.msra.mxu0 0.0
        %1491 = vmatprep.subr.mxu0 0.0
        %1492 = vmatpush1.msra.mxu0 0.0
        %1493 = vmatprep.subr.mxu0 0.0
        %1494 = vmatpush1.msra.mxu0 0.0
        %1495 = vmatprep.subr.mxu0 0.0
        %1496 = vmatpush1.msra.mxu0 0.0
        %1497 = vmatprep.subr.mxu0 0.0
        %1498 = vmatpush1.msra.mxu0 0.0
        %1499 = vmatprep.subr.mxu0 0.0
        %1500 = vmatpush1.msra.mxu0 0.0
        %1501 = vmatprep.subr.mxu0 0.0
        %1502 = vmatpush1.msra.mxu0 0.0
        %1503 = vmatprep.subr.mxu0 0.0
        %1504 = vmatpush1.msra.mxu0 0.0
        %1505 = vmatprep.subr.mxu0 0.0
        %1506 = vmatpush1.msra.mxu0 0.0
        %1507 = vmatprep.subr.mxu0 0.0
        %1508 = vmatpush1.msra.mxu0 0.0
        %1509 = vmatprep.subr.mxu0 0.0
        %1510 = vmatpush1.msra.mxu0 0.0
        %1511 = vmatprep.subr.mxu0 0.0
        %1512 = vmatpush1.msra.mxu0 0.0
        %1513 = vmatprep.subr.mxu0 0.0
        %1514 = vmatpush1.msra.mxu0 0.0
        %1515 = vmatprep.subr.mxu0 0.0
        %1516 = vmatpush1.msra.mxu0 0.0
        %1517 = vmatprep.subr.mxu0 0.0
        %1518 = vmatpush1.msra.mxu0 0.0
        %1519 = vmatprep.mubr.f32.mxu0 0.0
        %1520 = vmatmul.mubr.f32.gmra.mrb[0].mxu0 %v1448
        %v1521 = vpop.f32.mrb[0].mxu0
        %v1522 = vadd.f32 0.0, %v1521
        %v1523 = vpop.f32.mrb[0].mxu0
        %1524 = vmatprep.mubr.f32.mxu0 0.0
        %1525 = vmatmul.mubr.f32.gmra.mrb[0].mxu0 %v1451
        %v1526 = vpop.f32.mrb[0].mxu0
        %v1527 = vadd.f32 0.0, %v1526
        %v1528 = vpop.f32.mrb[0].mxu0
        %1529 = vdwg.mxu0
        %v1530 = vadd.f32 %v1421, %v1522
        %v1531 = vadd.f32 %v1422, %v1527
        %v1532 = vld [vmem:[%s429] sm:$0xff]
        %v1533 = vld [vmem:[%s429 + $0x8] sm:$0xff]
        %v1534 = vld [vmem:[%s163 + $0x5] sm:$0x1]
        %v1535 = vld [vmem:[%s163 + $0xd] sm:$0x1]
        %v1536 = vld [vmem:[%s163 + $0x15] sm:$0x1]
        %v1537 = vld [vmem:[%s163 + $0x1d] sm:$0x1]
        %v1538 = vld [vmem:[%s163 + $0x25] sm:$0x1]
        %v1539 = vld [vmem:[%s163 + $0x2d] sm:$0x1]
        %v1546 = vrot.slane %v1535, 7
        %v1547 = vsel %vm208, %v1546, %v1534
        %v1548 = vrot.slane %v1536, 6
        %v1549 = vsel %vm211, %v1548, %v1547
        %v1550 = vrot.slane %v1537, 5
        %v1551 = vsel %vm214, %v1550, %v1549
        %v1552 = vrot.slane %v1538, 4
        %v1553 = vsel %vm217, %v1552, %v1551
        %v1554 = vrot.slane %v1539, 3
        %v1555 = vsel %vm220, %v1554, %v1553
        %v1557 = vsel %vm222, %v1532, 0
        %v1560 = vsel %vm222, %v1533, 0
        %v1562 = vsel %vm229, %v1555, 0
        %1564 = vmatprep.subr.mxu0 0.0
        %1565 = vmatpush1.msra.mxu0 %v1562
        %1566 = vmatprep.subr.mxu0 0.0
        %1567 = vmatpush1.msra.mxu0 0.0
        %1568 = vmatprep.subr.mxu0 0.0
        %1569 = vmatpush1.msra.mxu0 0.0
        %1570 = vmatprep.subr.mxu0 0.0
        %1571 = vmatpush1.msra.mxu0 0.0
        %1572 = vmatprep.subr.mxu0 0.0
        %1573 = vmatpush1.msra.mxu0 0.0
        %1574 = vmatprep.subr.mxu0 0.0
        %1575 = vmatpush1.msra.mxu0 0.0
        %1576 = vmatprep.subr.mxu0 0.0
        %1577 = vmatpush1.msra.mxu0 0.0
        %1578 = vmatprep.subr.mxu0 0.0
        %1579 = vmatpush1.msra.mxu0 0.0
        %1580 = vmatprep.subr.mxu0 0.0
        %1581 = vmatpush1.msra.mxu0 0.0
        %1582 = vmatprep.subr.mxu0 0.0
        %1583 = vmatpush1.msra.mxu0 0.0
        %1584 = vmatprep.subr.mxu0 0.0
        %1585 = vmatpush1.msra.mxu0 0.0
        %1586 = vmatprep.subr.mxu0 0.0
        %1587 = vmatpush1.msra.mxu0 0.0
        %1588 = vmatprep.subr.mxu0 0.0
        %1589 = vmatpush1.msra.mxu0 0.0
        %1590 = vmatprep.subr.mxu0 0.0
        %1591 = vmatpush1.msra.mxu0 0.0
        %1592 = vmatprep.subr.mxu0 0.0
        %1593 = vmatpush1.msra.mxu0 0.0
        %1594 = vmatprep.subr.mxu0 0.0
        %1595 = vmatpush1.msra.mxu0 0.0
        %1596 = vmatprep.subr.mxu0 0.0
        %1597 = vmatpush1.msra.mxu0 0.0
        %1598 = vmatprep.subr.mxu0 0.0
        %1599 = vmatpush1.msra.mxu0 0.0
        %1600 = vmatprep.subr.mxu0 0.0
        %1601 = vmatpush1.msra.mxu0 0.0
        %1602 = vmatprep.subr.mxu0 0.0
        %1603 = vmatpush1.msra.mxu0 0.0
        %1604 = vmatprep.subr.mxu0 0.0
        %1605 = vmatpush1.msra.mxu0 0.0
        %1606 = vmatprep.subr.mxu0 0.0
        %1607 = vmatpush1.msra.mxu0 0.0
        %1608 = vmatprep.subr.mxu0 0.0
        %1609 = vmatpush1.msra.mxu0 0.0
        %1610 = vmatprep.subr.mxu0 0.0
        %1611 = vmatpush1.msra.mxu0 0.0
        %1612 = vmatprep.subr.mxu0 0.0
        %1613 = vmatpush1.msra.mxu0 0.0
        %1614 = vmatprep.subr.mxu0 0.0
        %1615 = vmatpush1.msra.mxu0 0.0
        %1616 = vmatprep.subr.mxu0 0.0
        %1617 = vmatpush1.msra.mxu0 0.0
        %1618 = vmatprep.subr.mxu0 0.0
        %1619 = vmatpush1.msra.mxu0 0.0
        %1620 = vmatprep.subr.mxu0 0.0
        %1621 = vmatpush1.msra.mxu0 0.0
        %1622 = vmatprep.subr.mxu0 0.0
        %1623 = vmatpush1.msra.mxu0 0.0
        %1624 = vmatprep.subr.mxu0 0.0
        %1625 = vmatpush1.msra.mxu0 0.0
        %1626 = vmatprep.subr.mxu0 0.0
        %1627 = vmatpush1.msra.mxu0 0.0
        %1628 = vmatprep.mubr.f32.mxu0 0.0
        %1629 = vmatmul.mubr.f32.gmra.mrb[0].mxu0 %v1557
        %v1630 = vpop.f32.mrb[0].mxu0
        %v1631 = vadd.f32 0.0, %v1630
        %v1632 = vpop.f32.mrb[0].mxu0
        %1633 = vmatprep.mubr.f32.mxu0 0.0
        %1634 = vmatmul.mubr.f32.gmra.mrb[0].mxu0 %v1560
        %v1635 = vpop.f32.mrb[0].mxu0
        %v1636 = vadd.f32 0.0, %v1635
        %v1637 = vpop.f32.mrb[0].mxu0
        %1638 = vdwg.mxu0
        %v1639 = vadd.f32 %v1530, %v1631
        %v1640 = vadd.f32 %v1531, %v1636
        %v1641 = vxor.u32 %v1640, 2147483648
        %v1642 = vmul.f32 %v1641, 1.442695
        %v1643 = vpow.pop %v1642
        %v1644 = vadd.f32 %v1643, 1.0
        %v1645 = vrcp.pop %v1644
        %v1646 = vmul.f32 1.0, %v1645
        %v1647 = vmul.f32 %v1639, %v1646
        %v1650 = vunpack.c.l.s4 1966171168
        %v1651 = vunpack.c.0.s8 %v1650
        %v1652 = vlaneseq
        %v1653 = vshrl.u32 %v1652, 7
        %v1654 = vsub.s32 %v1651, %v1653
        %v1655 = vrot.slane %v1647, %v1654
        %v1656 = vcombine.high %v1655, %v1655
        %v1658 = vunpack.c.l.s4 1966171168
        %v1659 = vunpack.c.0.s8 %v1658
        %v1660 = vlaneseq
        %v1661 = vshrl.u32 %v1660, 7
        %v1662 = vsub.s32 %v1659, %v1661
        %v1663 = vrot.slane %v1655, %v1662
        %v1665 = vunpack.c.l.s4 1966171168
        %v1666 = vunpack.c.0.s8 %v1665
        %v1667 = vlaneseq
        %v1668 = vshrl.u32 %v1667, 7
        %v1669 = vsub.s32 %v1666, %v1668
        %v1670 = vrot.slane %v1656, %v1669
        %v1671 = vcombine.high %v1663, %v1663
        %v1672 = vcombine.high %v1670, %v1670
        %1677 = vst.msk [vmem:[%s190 + $0x3] sm:$0x1] %vm575, %v1663
        %1678 = vst.msk [vmem:[%s190 + $0xb] sm:$0x1] %vm575, %v1670
        %1679 = vst.msk [vmem:[%s190 + $0x13] sm:$0x1] %vm575, %v1671
        %1680 = vst.msk [vmem:[%s190 + $0x1b] sm:$0x1] %vm575, %v1672
        %v1681 = vld [vmem:[%s1] sm:$0xff]
        %v1682 = vld [vmem:[%s1 + $0x8] sm:$0xff]
        %v1683 = vld [vmem:[%s163 + $0x4] sm:$0x1]
        %v1684 = vld [vmem:[%s163 + $0xc] sm:$0x1]
        %v1685 = vld [vmem:[%s163 + $0x14] sm:$0x1]
        %v1686 = vld [vmem:[%s163 + $0x1c] sm:$0x1]
        %v1687 = vld [vmem:[%s163 + $0x24] sm:$0x1]
        %v1688 = vld [vmem:[%s163 + $0x2c] sm:$0x1]
        %v1695 = vrot.slane %v1684, 7
        %v1696 = vsel %vm208, %v1695, %v1683
        %v1697 = vrot.slane %v1685, 6
        %v1698 = vsel %vm211, %v1697, %v1696
        %v1699 = vrot.slane %v1686, 5
        %v1700 = vsel %vm214, %v1699, %v1698
        %v1701 = vrot.slane %v1687, 4
        %v1702 = vsel %vm217, %v1701, %v1700
        %v1703 = vrot.slane %v1688, 3
        %v1704 = vsel %vm220, %v1703, %v1702
        %v1706 = vsel %vm222, %v1681, 0
        %v1709 = vsel %vm222, %v1682, 0
        %v1711 = vsel %vm229, %v1704, 0
        %1713 = vmatprep.subr.mxu0 0.0
        %1714 = vmatpush1.msra.mxu0 %v1711
        %1715 = vmatprep.subr.mxu0 0.0
        %1716 = vmatpush1.msra.mxu0 0.0
        %1717 = vmatprep.subr.mxu0 0.0
        %1718 = vmatpush1.msra.mxu0 0.0
        %1719 = vmatprep.subr.mxu0 0.0
        %1720 = vmatpush1.msra.mxu0 0.0
        %1721 = vmatprep.subr.mxu0 0.0
        %1722 = vmatpush1.msra.mxu0 0.0
        %1723 = vmatprep.subr.mxu0 0.0
        %1724 = vmatpush1.msra.mxu0 0.0
        %1725 = vmatprep.subr.mxu0 0.0
        %1726 = vmatpush1.msra.mxu0 0.0
        %1727 = vmatprep.subr.mxu0 0.0
        %1728 = vmatpush1.msra.mxu0 0.0
        %1729 = vmatprep.subr.mxu0 0.0
        %1730 = vmatpush1.msra.mxu0 0.0
        %1731 = vmatprep.subr.mxu0 0.0
        %1732 = vmatpush1.msra.mxu0 0.0
        %1733 = vmatprep.subr.mxu0 0.0
        %1734 = vmatpush1.msra.mxu0 0.0
        %1735 = vmatprep.subr.mxu0 0.0
        %1736 = vmatpush1.msra.mxu0 0.0
        %1737 = vmatprep.subr.mxu0 0.0
        %1738 = vmatpush1.msra.mxu0 0.0
        %1739 = vmatprep.subr.mxu0 0.0
        %1740 = vmatpush1.msra.mxu0 0.0
        %1741 = vmatprep.subr.mxu0 0.0
        %1742 = vmatpush1.msra.mxu0 0.0
        %1743 = vmatprep.subr.mxu0 0.0
        %1744 = vmatpush1.msra.mxu0 0.0
        %1745 = vmatprep.subr.mxu0 0.0
        %1746 = vmatpush1.msra.mxu0 0.0
        %1747 = vmatprep.subr.mxu0 0.0
        %1748 = vmatpush1.msra.mxu0 0.0
        %1749 = vmatprep.subr.mxu0 0.0
        %1750 = vmatpush1.msra.mxu0 0.0
        %1751 = vmatprep.subr.mxu0 0.0
        %1752 = vmatpush1.msra.mxu0 0.0
        %1753 = vmatprep.subr.mxu0 0.0
        %1754 = vmatpush1.msra.mxu0 0.0
        %1755 = vmatprep.subr.mxu0 0.0
        %1756 = vmatpush1.msra.mxu0 0.0
        %1757 = vmatprep.subr.mxu0 0.0
        %1758 = vmatpush1.msra.mxu0 0.0
        %1759 = vmatprep.subr.mxu0 0.0
        %1760 = vmatpush1.msra.mxu0 0.0
        %1761 = vmatprep.subr.mxu0 0.0
        %1762 = vmatpush1.msra.mxu0 0.0
        %1763 = vmatprep.subr.mxu0 0.0
        %1764 = vmatpush1.msra.mxu0 0.0
        %1765 = vmatprep.subr.mxu0 0.0
        %1766 = vmatpush1.msra.mxu0 0.0
        %1767 = vmatprep.subr.mxu0 0.0
        %1768 = vmatpush1.msra.mxu0 0.0
        %1769 = vmatprep.subr.mxu0 0.0
        %1770 = vmatpush1.msra.mxu0 0.0
        %1771 = vmatprep.subr.mxu0 0.0
        %1772 = vmatpush1.msra.mxu0 0.0
        %1773 = vmatprep.subr.mxu0 0.0
        %1774 = vmatpush1.msra.mxu0 0.0
        %1775 = vmatprep.subr.mxu0 0.0
        %1776 = vmatpush1.msra.mxu0 0.0
        %1777 = vmatprep.mubr.f32.mxu0 0.0
        %1778 = vmatmul.mubr.f32.gmra.mrb[0].mxu0 %v1706
        %v1779 = vpop.f32.mrb[0].mxu0
        %v1780 = vadd.f32 0.0, %v1779
        %v1781 = vpop.f32.mrb[0].mxu0
        %1782 = vmatprep.mubr.f32.mxu0 0.0
        %1783 = vmatmul.mubr.f32.gmra.mrb[0].mxu0 %v1709
        %v1784 = vpop.f32.mrb[0].mxu0
        %v1785 = vadd.f32 0.0, %v1784
        %v1786 = vpop.f32.mrb[0].mxu0
        %1787 = vdwg.mxu0
        %v1788 = vadd.f32 %v310, %v1780
        %v1789 = vadd.f32 %v315, %v1785
        %v1790 = vld [vmem:[%s319] sm:$0xff]
        %v1791 = vld [vmem:[%s319 + $0x8] sm:$0xff]
        %v1792 = vld [vmem:[%s163 + $0x5] sm:$0x1]
        %v1793 = vld [vmem:[%s163 + $0xd] sm:$0x1]
        %v1794 = vld [vmem:[%s163 + $0x15] sm:$0x1]
        %v1795 = vld [vmem:[%s163 + $0x1d] sm:$0x1]
        %v1796 = vld [vmem:[%s163 + $0x25] sm:$0x1]
        %v1797 = vld [vmem:[%s163 + $0x2d] sm:$0x1]
        %v1804 = vrot.slane %v1793, 7
        %v1805 = vsel %vm208, %v1804, %v1792
        %v1806 = vrot.slane %v1794, 6
        %v1807 = vsel %vm211, %v1806, %v1805
        %v1808 = vrot.slane %v1795, 5
        %v1809 = vsel %vm214, %v1808, %v1807
        %v1810 = vrot.slane %v1796, 4
        %v1811 = vsel %vm217, %v1810, %v1809
        %v1812 = vrot.slane %v1797, 3
        %v1813 = vsel %vm220, %v1812, %v1811
        %v1815 = vsel %vm222, %v1790, 0
        %v1818 = vsel %vm222, %v1791, 0
        %v1820 = vsel %vm229, %v1813, 0
        %1822 = vmatprep.subr.mxu0 0.0
        %1823 = vmatpush1.msra.mxu0 %v1820
        %1824 = vmatprep.subr.mxu0 0.0
        %1825 = vmatpush1.msra.mxu0 0.0
        %1826 = vmatprep.subr.mxu0 0.0
        %1827 = vmatpush1.msra.mxu0 0.0
        %1828 = vmatprep.subr.mxu0 0.0
        %1829 = vmatpush1.msra.mxu0 0.0
        %1830 = vmatprep.subr.mxu0 0.0
        %1831 = vmatpush1.msra.mxu0 0.0
        %1832 = vmatprep.subr.mxu0 0.0
        %1833 = vmatpush1.msra.mxu0 0.0
        %1834 = vmatprep.subr.mxu0 0.0
        %1835 = vmatpush1.msra.mxu0 0.0
        %1836 = vmatprep.subr.mxu0 0.0
        %1837 = vmatpush1.msra.mxu0 0.0
        %1838 = vmatprep.subr.mxu0 0.0
        %1839 = vmatpush1.msra.mxu0 0.0
        %1840 = vmatprep.subr.mxu0 0.0
        %1841 = vmatpush1.msra.mxu0 0.0
        %1842 = vmatprep.subr.mxu0 0.0
        %1843 = vmatpush1.msra.mxu0 0.0
        %1844 = vmatprep.subr.mxu0 0.0
        %1845 = vmatpush1.msra.mxu0 0.0
        %1846 = vmatprep.subr.mxu0 0.0
        %1847 = vmatpush1.msra.mxu0 0.0
        %1848 = vmatprep.subr.mxu0 0.0
        %1849 = vmatpush1.msra.mxu0 0.0
        %1850 = vmatprep.subr.mxu0 0.0
        %1851 = vmatpush1.msra.mxu0 0.0
        %1852 = vmatprep.subr.mxu0 0.0
        %1853 = vmatpush1.msra.mxu0 0.0
        %1854 = vmatprep.subr.mxu0 0.0
        %1855 = vmatpush1.msra.mxu0 0.0
        %1856 = vmatprep.subr.mxu0 0.0
        %1857 = vmatpush1.msra.mxu0 0.0
        %1858 = vmatprep.subr.mxu0 0.0
        %1859 = vmatpush1.msra.mxu0 0.0
        %1860 = vmatprep.subr.mxu0 0.0
        %1861 = vmatpush1.msra.mxu0 0.0
        %1862 = vmatprep.subr.mxu0 0.0
        %1863 = vmatpush1.msra.mxu0 0.0
        %1864 = vmatprep.subr.mxu0 0.0
        %1865 = vmatpush1.msra.mxu0 0.0
        %1866 = vmatprep.subr.mxu0 0.0
        %1867 = vmatpush1.msra.mxu0 0.0
        %1868 = vmatprep.subr.mxu0 0.0
        %1869 = vmatpush1.msra.mxu0 0.0
        %1870 = vmatprep.subr.mxu0 0.0
        %1871 = vmatpush1.msra.mxu0 0.0
        %1872 = vmatprep.subr.mxu0 0.0
        %1873 = vmatpush1.msra.mxu0 0.0
        %1874 = vmatprep.subr.mxu0 0.0
        %1875 = vmatpush1.msra.mxu0 0.0
        %1876 = vmatprep.subr.mxu0 0.0
        %1877 = vmatpush1.msra.mxu0 0.0
        %1878 = vmatprep.subr.mxu0 0.0
        %1879 = vmatpush1.msra.mxu0 0.0
        %1880 = vmatprep.subr.mxu0 0.0
        %1881 = vmatpush1.msra.mxu0 0.0
        %1882 = vmatprep.subr.mxu0 0.0
        %1883 = vmatpush1.msra.mxu0 0.0
        %1884 = vmatprep.subr.mxu0 0.0
        %1885 = vmatpush1.msra.mxu0 0.0
        %1886 = vmatprep.mubr.f32.mxu0 0.0
        %1887 = vmatmul.mubr.f32.gmra.mrb[0].mxu0 %v1815
        %v1888 = vpop.f32.mrb[0].mxu0
        %v1889 = vadd.f32 0.0, %v1888
        %v1890 = vpop.f32.mrb[0].mxu0
        %1891 = vmatprep.mubr.f32.mxu0 0.0
        %1892 = vmatmul.mubr.f32.gmra.mrb[0].mxu0 %v1818
        %v1893 = vpop.f32.mrb[0].mxu0
        %v1894 = vadd.f32 0.0, %v1893
        %v1895 = vpop.f32.mrb[0].mxu0
        %1896 = vdwg.mxu0
        %v1897 = vadd.f32 %v1788, %v1889
        %v1898 = vadd.f32 %v1789, %v1894
        %v1899 = vld [vmem:[%s429] sm:$0xff]
        %v1900 = vld [vmem:[%s429 + $0x8] sm:$0xff]
        %v1901 = vld [vmem:[%s163 + $0x6] sm:$0x1]
        %v1902 = vld [vmem:[%s163 + $0xe] sm:$0x1]
        %v1903 = vld [vmem:[%s163 + $0x16] sm:$0x1]
        %v1904 = vld [vmem:[%s163 + $0x1e] sm:$0x1]
        %v1905 = vld [vmem:[%s163 + $0x26] sm:$0x1]
        %v1906 = vld [vmem:[%s163 + $0x2e] sm:$0x1]
        %v1913 = vrot.slane %v1902, 7
        %v1914 = vsel %vm208, %v1913, %v1901
        %v1915 = vrot.slane %v1903, 6
        %v1916 = vsel %vm211, %v1915, %v1914
        %v1917 = vrot.slane %v1904, 5
        %v1918 = vsel %vm214, %v1917, %v1916
        %v1919 = vrot.slane %v1905, 4
        %v1920 = vsel %vm217, %v1919, %v1918
        %v1921 = vrot.slane %v1906, 3
        %v1922 = vsel %vm220, %v1921, %v1920
        %v1924 = vsel %vm222, %v1899, 0
        %v1927 = vsel %vm222, %v1900, 0
        %v1929 = vsel %vm229, %v1922, 0
        %1931 = vmatprep.subr.mxu0 0.0
        %1932 = vmatpush1.msra.mxu0 %v1929
        %1933 = vmatprep.subr.mxu0 0.0
        %1934 = vmatpush1.msra.mxu0 0.0
        %1935 = vmatprep.subr.mxu0 0.0
        %1936 = vmatpush1.msra.mxu0 0.0
        %1937 = vmatprep.subr.mxu0 0.0
        %1938 = vmatpush1.msra.mxu0 0.0
        %1939 = vmatprep.subr.mxu0 0.0
        %1940 = vmatpush1.msra.mxu0 0.0
        %1941 = vmatprep.subr.mxu0 0.0
        %1942 = vmatpush1.msra.mxu0 0.0
        %1943 = vmatprep.subr.mxu0 0.0
        %1944 = vmatpush1.msra.mxu0 0.0
        %1945 = vmatprep.subr.mxu0 0.0
        %1946 = vmatpush1.msra.mxu0 0.0
        %1947 = vmatprep.subr.mxu0 0.0
        %1948 = vmatpush1.msra.mxu0 0.0
        %1949 = vmatprep.subr.mxu0 0.0
        %1950 = vmatpush1.msra.mxu0 0.0
        %1951 = vmatprep.subr.mxu0 0.0
        %1952 = vmatpush1.msra.mxu0 0.0
        %1953 = vmatprep.subr.mxu0 0.0
        %1954 = vmatpush1.msra.mxu0 0.0
        %1955 = vmatprep.subr.mxu0 0.0
        %1956 = vmatpush1.msra.mxu0 0.0
        %1957 = vmatprep.subr.mxu0 0.0
        %1958 = vmatpush1.msra.mxu0 0.0
        %1959 = vmatprep.subr.mxu0 0.0
        %1960 = vmatpush1.msra.mxu0 0.0
        %1961 = vmatprep.subr.mxu0 0.0
        %1962 = vmatpush1.msra.mxu0 0.0
        %1963 = vmatprep.subr.mxu0 0.0
        %1964 = vmatpush1.msra.mxu0 0.0
        %1965 = vmatprep.subr.mxu0 0.0
        %1966 = vmatpush1.msra.mxu0 0.0
        %1967 = vmatprep.subr.mxu0 0.0
        %1968 = vmatpush1.msra.mxu0 0.0
        %1969 = vmatprep.subr.mxu0 0.0
        %1970 = vmatpush1.msra.mxu0 0.0
        %1971 = vmatprep.subr.mxu0 0.0
        %1972 = vmatpush1.msra.mxu0 0.0
        %1973 = vmatprep.subr.mxu0 0.0
        %1974 = vmatpush1.msra.mxu0 0.0
        %1975 = vmatprep.subr.mxu0 0.0
        %1976 = vmatpush1.msra.mxu0 0.0
        %1977 = vmatprep.subr.mxu0 0.0
        %1978 = vmatpush1.msra.mxu0 0.0
        %1979 = vmatprep.subr.mxu0 0.0
        %1980 = vmatpush1.msra.mxu0 0.0
        %1981 = vmatprep.subr.mxu0 0.0
        %1982 = vmatpush1.msra.mxu0 0.0
        %1983 = vmatprep.subr.mxu0 0.0
        %1984 = vmatpush1.msra.mxu0 0.0
        %1985 = vmatprep.subr.mxu0 0.0
        %1986 = vmatpush1.msra.mxu0 0.0
        %1987 = vmatprep.subr.mxu0 0.0
        %1988 = vmatpush1.msra.mxu0 0.0
        %1989 = vmatprep.subr.mxu0 0.0
        %1990 = vmatpush1.msra.mxu0 0.0
        %1991 = vmatprep.subr.mxu0 0.0
        %1992 = vmatpush1.msra.mxu0 0.0
        %1993 = vmatprep.subr.mxu0 0.0
        %1994 = vmatpush1.msra.mxu0 0.0
        %1995 = vmatprep.mubr.f32.mxu0 0.0
        %1996 = vmatmul.mubr.f32.gmra.mrb[0].mxu0 %v1924
        %v1997 = vpop.f32.mrb[0].mxu0
        %v1998 = vadd.f32 0.0, %v1997
        %v1999 = vpop.f32.mrb[0].mxu0
        %2000 = vmatprep.mubr.f32.mxu0 0.0
        %2001 = vmatmul.mubr.f32.gmra.mrb[0].mxu0 %v1927
        %v2002 = vpop.f32.mrb[0].mxu0
        %v2003 = vadd.f32 0.0, %v2002
        %v2004 = vpop.f32.mrb[0].mxu0
        %2005 = vdwg.mxu0
        %v2006 = vadd.f32 %v1897, %v1998
        %v2007 = vadd.f32 %v1898, %v2003
        %v2008 = vxor.u32 %v2007, 2147483648
        %v2009 = vmul.f32 %v2008, 1.442695
        %v2010 = vpow.pop %v2009
        %v2011 = vadd.f32 %v2010, 1.0
        %v2012 = vrcp.pop %v2011
        %v2013 = vmul.f32 1.0, %v2012
        %v2014 = vmul.f32 %v2006, %v2013
        %v2017 = vunpack.c.l.s4 1966171168
        %v2018 = vunpack.c.0.s8 %v2017
        %v2019 = vlaneseq
        %v2020 = vshrl.u32 %v2019, 7
        %v2021 = vsub.s32 %v2018, %v2020
        %v2022 = vrot.slane %v2014, %v2021
        %v2023 = vcombine.high %v2022, %v2022
        %v2025 = vunpack.c.l.s4 1966171168
        %v2026 = vunpack.c.0.s8 %v2025
        %v2027 = vlaneseq
        %v2028 = vshrl.u32 %v2027, 7
        %v2029 = vsub.s32 %v2026, %v2028
        %v2030 = vrot.slane %v2022, %v2029
        %v2032 = vunpack.c.l.s4 1966171168
        %v2033 = vunpack.c.0.s8 %v2032
        %v2034 = vlaneseq
        %v2035 = vshrl.u32 %v2034, 7
        %v2036 = vsub.s32 %v2033, %v2035
        %v2037 = vrot.slane %v2023, %v2036
        %v2038 = vcombine.high %v2030, %v2030
        %v2039 = vcombine.high %v2037, %v2037
        %2044 = vst.msk [vmem:[%s190 + $0x4] sm:$0x1] %vm575, %v2030
        %2045 = vst.msk [vmem:[%s190 + $0xc] sm:$0x1] %vm575, %v2037
        %2046 = vst.msk [vmem:[%s190 + $0x14] sm:$0x1] %vm575, %v2038
        %2047 = vst.msk [vmem:[%s190 + $0x1c] sm:$0x1] %vm575, %v2039
        %v2048 = vld [vmem:[%s1] sm:$0xff]
        %v2049 = vld [vmem:[%s1 + $0x8] sm:$0xff]
        %v2050 = vld [vmem:[%s163 + $0x5] sm:$0x1]
        %v2051 = vld [vmem:[%s163 + $0xd] sm:$0x1]
        %v2052 = vld [vmem:[%s163 + $0x15] sm:$0x1]
        %v2053 = vld [vmem:[%s163 + $0x1d] sm:$0x1]
        %v2054 = vld [vmem:[%s163 + $0x25] sm:$0x1]
        %v2055 = vld [vmem:[%s163 + $0x2d] sm:$0x1]
        %v2062 = vrot.slane %v2051, 7
        %v2063 = vsel %vm208, %v2062, %v2050
        %v2064 = vrot.slane %v2052, 6
        %v2065 = vsel %vm211, %v2064, %v2063
        %v2066 = vrot.slane %v2053, 5
        %v2067 = vsel %vm214, %v2066, %v2065
        %v2068 = vrot.slane %v2054, 4
        %v2069 = vsel %vm217, %v2068, %v2067
        %v2070 = vrot.slane %v2055, 3
        %v2071 = vsel %vm220, %v2070, %v2069
        %v2073 = vsel %vm222, %v2048, 0
        %v2076 = vsel %vm222, %v2049, 0
        %v2078 = vsel %vm229, %v2071, 0
        %2080 = vmatprep.subr.mxu0 0.0
        %2081 = vmatpush1.msra.mxu0 %v2078
        %2082 = vmatprep.subr.mxu0 0.0
        %2083 = vmatpush1.msra.mxu0 0.0
        %2084 = vmatprep.subr.mxu0 0.0
        %2085 = vmatpush1.msra.mxu0 0.0
        %2086 = vmatprep.subr.mxu0 0.0
        %2087 = vmatpush1.msra.mxu0 0.0
        %2088 = vmatprep.subr.mxu0 0.0
        %2089 = vmatpush1.msra.mxu0 0.0
        %2090 = vmatprep.subr.mxu0 0.0
        %2091 = vmatpush1.msra.mxu0 0.0
        %2092 = vmatprep.subr.mxu0 0.0
        %2093 = vmatpush1.msra.mxu0 0.0
        %2094 = vmatprep.subr.mxu0 0.0
        %2095 = vmatpush1.msra.mxu0 0.0
        %2096 = vmatprep.subr.mxu0 0.0
        %2097 = vmatpush1.msra.mxu0 0.0
        %2098 = vmatprep.subr.mxu0 0.0
        %2099 = vmatpush1.msra.mxu0 0.0
        %2100 = vmatprep.subr.mxu0 0.0
        %2101 = vmatpush1.msra.mxu0 0.0
        %2102 = vmatprep.subr.mxu0 0.0
        %2103 = vmatpush1.msra.mxu0 0.0
        %2104 = vmatprep.subr.mxu0 0.0
        %2105 = vmatpush1.msra.mxu0 0.0
        %2106 = vmatprep.subr.mxu0 0.0
        %2107 = vmatpush1.msra.mxu0 0.0
        %2108 = vmatprep.subr.mxu0 0.0
        %2109 = vmatpush1.msra.mxu0 0.0
        %2110 = vmatprep.subr.mxu0 0.0
        %2111 = vmatpush1.msra.mxu0 0.0
        %2112 = vmatprep.subr.mxu0 0.0
        %2113 = vmatpush1.msra.mxu0 0.0
        %2114 = vmatprep.subr.mxu0 0.0
        %2115 = vmatpush1.msra.mxu0 0.0
        %2116 = vmatprep.subr.mxu0 0.0
        %2117 = vmatpush1.msra.mxu0 0.0
        %2118 = vmatprep.subr.mxu0 0.0
        %2119 = vmatpush1.msra.mxu0 0.0
        %2120 = vmatprep.subr.mxu0 0.0
        %2121 = vmatpush1.msra.mxu0 0.0
        %2122 = vmatprep.subr.mxu0 0.0
        %2123 = vmatpush1.msra.mxu0 0.0
        %2124 = vmatprep.subr.mxu0 0.0
        %2125 = vmatpush1.msra.mxu0 0.0
        %2126 = vmatprep.subr.mxu0 0.0
        %2127 = vmatpush1.msra.mxu0 0.0
        %2128 = vmatprep.subr.mxu0 0.0
        %2129 = vmatpush1.msra.mxu0 0.0
        %2130 = vmatprep.subr.mxu0 0.0
        %2131 = vmatpush1.msra.mxu0 0.0
        %2132 = vmatprep.subr.mxu0 0.0
        %2133 = vmatpush1.msra.mxu0 0.0
        %2134 = vmatprep.subr.mxu0 0.0
        %2135 = vmatpush1.msra.mxu0 0.0
        %2136 = vmatprep.subr.mxu0 0.0
        %2137 = vmatpush1.msra.mxu0 0.0
        %2138 = vmatprep.subr.mxu0 0.0
        %2139 = vmatpush1.msra.mxu0 0.0
        %2140 = vmatprep.subr.mxu0 0.0
        %2141 = vmatpush1.msra.mxu0 0.0
        %2142 = vmatprep.subr.mxu0 0.0
        %2143 = vmatpush1.msra.mxu0 0.0
        %2144 = vmatprep.mubr.f32.mxu0 0.0
        %2145 = vmatmul.mubr.f32.gmra.mrb[0].mxu0 %v2073
        %v2146 = vpop.f32.mrb[0].mxu0
        %v2147 = vadd.f32 0.0, %v2146
        %v2148 = vpop.f32.mrb[0].mxu0
        %2149 = vmatprep.mubr.f32.mxu0 0.0
        %2150 = vmatmul.mubr.f32.gmra.mrb[0].mxu0 %v2076
        %v2151 = vpop.f32.mrb[0].mxu0
        %v2152 = vadd.f32 0.0, %v2151
        %v2153 = vpop.f32.mrb[0].mxu0
        %2154 = vdwg.mxu0
        %v2155 = vadd.f32 %v310, %v2147
        %v2156 = vadd.f32 %v315, %v2152
        %v2157 = vld [vmem:[%s319] sm:$0xff]
        %v2158 = vld [vmem:[%s319 + $0x8] sm:$0xff]
        %v2159 = vld [vmem:[%s163 + $0x6] sm:$0x1]
        %v2160 = vld [vmem:[%s163 + $0xe] sm:$0x1]
        %v2161 = vld [vmem:[%s163 + $0x16] sm:$0x1]
        %v2162 = vld [vmem:[%s163 + $0x1e] sm:$0x1]
        %v2163 = vld [vmem:[%s163 + $0x26] sm:$0x1]
        %v2164 = vld [vmem:[%s163 + $0x2e] sm:$0x1]
        %v2171 = vrot.slane %v2160, 7
        %v2172 = vsel %vm208, %v2171, %v2159
        %v2173 = vrot.slane %v2161, 6
        %v2174 = vsel %vm211, %v2173, %v2172
        %v2175 = vrot.slane %v2162, 5
        %v2176 = vsel %vm214, %v2175, %v2174
        %v2177 = vrot.slane %v2163, 4
        %v2178 = vsel %vm217, %v2177, %v2176
        %v2179 = vrot.slane %v2164, 3
        %v2180 = vsel %vm220, %v2179, %v2178
        %v2182 = vsel %vm222, %v2157, 0
        %v2185 = vsel %vm222, %v2158, 0
        %v2187 = vsel %vm229, %v2180, 0
        %2189 = vmatprep.subr.mxu0 0.0
        %2190 = vmatpush1.msra.mxu0 %v2187
        %2191 = vmatprep.subr.mxu0 0.0
        %2192 = vmatpush1.msra.mxu0 0.0
        %2193 = vmatprep.subr.mxu0 0.0
        %2194 = vmatpush1.msra.mxu0 0.0
        %2195 = vmatprep.subr.mxu0 0.0
        %2196 = vmatpush1.msra.mxu0 0.0
        %2197 = vmatprep.subr.mxu0 0.0
        %2198 = vmatpush1.msra.mxu0 0.0
        %2199 = vmatprep.subr.mxu0 0.0
        %2200 = vmatpush1.msra.mxu0 0.0
        %2201 = vmatprep.subr.mxu0 0.0
        %2202 = vmatpush1.msra.mxu0 0.0
        %2203 = vmatprep.subr.mxu0 0.0
        %2204 = vmatpush1.msra.mxu0 0.0
        %2205 = vmatprep.subr.mxu0 0.0
        %2206 = vmatpush1.msra.mxu0 0.0
        %2207 = vmatprep.subr.mxu0 0.0
        %2208 = vmatpush1.msra.mxu0 0.0
        %2209 = vmatprep.subr.mxu0 0.0
        %2210 = vmatpush1.msra.mxu0 0.0
        %2211 = vmatprep.subr.mxu0 0.0
        %2212 = vmatpush1.msra.mxu0 0.0
        %2213 = vmatprep.subr.mxu0 0.0
        %2214 = vmatpush1.msra.mxu0 0.0
        %2215 = vmatprep.subr.mxu0 0.0
        %2216 = vmatpush1.msra.mxu0 0.0
        %2217 = vmatprep.subr.mxu0 0.0
        %2218 = vmatpush1.msra.mxu0 0.0
        %2219 = vmatprep.subr.mxu0 0.0
        %2220 = vmatpush1.msra.mxu0 0.0
        %2221 = vmatprep.subr.mxu0 0.0
        %2222 = vmatpush1.msra.mxu0 0.0
        %2223 = vmatprep.subr.mxu0 0.0
        %2224 = vmatpush1.msra.mxu0 0.0
        %2225 = vmatprep.subr.mxu0 0.0
        %2226 = vmatpush1.msra.mxu0 0.0
        %2227 = vmatprep.subr.mxu0 0.0
        %2228 = vmatpush1.msra.mxu0 0.0
        %2229 = vmatprep.subr.mxu0 0.0
        %2230 = vmatpush1.msra.mxu0 0.0
        %2231 = vmatprep.subr.mxu0 0.0
        %2232 = vmatpush1.msra.mxu0 0.0
        %2233 = vmatprep.subr.mxu0 0.0
        %2234 = vmatpush1.msra.mxu0 0.0
        %2235 = vmatprep.subr.mxu0 0.0
        %2236 = vmatpush1.msra.mxu0 0.0
        %2237 = vmatprep.subr.mxu0 0.0
        %2238 = vmatpush1.msra.mxu0 0.0
        %2239 = vmatprep.subr.mxu0 0.0
        %2240 = vmatpush1.msra.mxu0 0.0
        %2241 = vmatprep.subr.mxu0 0.0
        %2242 = vmatpush1.msra.mxu0 0.0
        %2243 = vmatprep.subr.mxu0 0.0
        %2244 = vmatpush1.msra.mxu0 0.0
        %2245 = vmatprep.subr.mxu0 0.0
        %2246 = vmatpush1.msra.mxu0 0.0
        %2247 = vmatprep.subr.mxu0 0.0
        %2248 = vmatpush1.msra.mxu0 0.0
        %2249 = vmatprep.subr.mxu0 0.0
        %2250 = vmatpush1.msra.mxu0 0.0
        %2251 = vmatprep.subr.mxu0 0.0
        %2252 = vmatpush1.msra.mxu0 0.0
        %2253 = vmatprep.mubr.f32.mxu0 0.0
        %2254 = vmatmul.mubr.f32.gmra.mrb[0].mxu0 %v2182
        %v2255 = vpop.f32.mrb[0].mxu0
        %v2256 = vadd.f32 0.0, %v2255
        %v2257 = vpop.f32.mrb[0].mxu0
        %2258 = vmatprep.mubr.f32.mxu0 0.0
        %2259 = vmatmul.mubr.f32.gmra.mrb[0].mxu0 %v2185
        %v2260 = vpop.f32.mrb[0].mxu0
        %v2261 = vadd.f32 0.0, %v2260
        %v2262 = vpop.f32.mrb[0].mxu0
        %2263 = vdwg.mxu0
        %v2264 = vadd.f32 %v2155, %v2256
        %v2265 = vadd.f32 %v2156, %v2261
        %v2266 = vld [vmem:[%s429] sm:$0xff]
        %v2267 = vld [vmem:[%s429 + $0x8] sm:$0xff]
        %v2268 = vld [vmem:[%s163 + $0x7] sm:$0x1]
        %v2269 = vld [vmem:[%s163 + $0xf] sm:$0x1]
        %v2270 = vld [vmem:[%s163 + $0x17] sm:$0x1]
        %v2271 = vld [vmem:[%s163 + $0x1f] sm:$0x1]
        %v2272 = vld [vmem:[%s163 + $0x27] sm:$0x1]
        %v2273 = vld [vmem:[%s163 + $0x2f] sm:$0x1]
        %v2280 = vrot.slane %v2269, 7
        %v2281 = vsel %vm208, %v2280, %v2268
        %v2282 = vrot.slane %v2270, 6
        %v2283 = vsel %vm211, %v2282, %v2281
        %v2284 = vrot.slane %v2271, 5
        %v2285 = vsel %vm214, %v2284, %v2283
        %v2286 = vrot.slane %v2272, 4
        %v2287 = vsel %vm217, %v2286, %v2285
        %v2288 = vrot.slane %v2273, 3
        %v2289 = vsel %vm220, %v2288, %v2287
        %v2291 = vsel %vm222, %v2266, 0
        %v2294 = vsel %vm222, %v2267, 0
        %v2296 = vsel %vm229, %v2289, 0
        %2298 = vmatprep.subr.mxu0 0.0
        %2299 = vmatpush1.msra.mxu0 %v2296
        %2300 = vmatprep.subr.mxu0 0.0
        %2301 = vmatpush1.msra.mxu0 0.0
        %2302 = vmatprep.subr.mxu0 0.0
        %2303 = vmatpush1.msra.mxu0 0.0
        %2304 = vmatprep.subr.mxu0 0.0
        %2305 = vmatpush1.msra.mxu0 0.0
        %2306 = vmatprep.subr.mxu0 0.0
        %2307 = vmatpush1.msra.mxu0 0.0
        %2308 = vmatprep.subr.mxu0 0.0
        %2309 = vmatpush1.msra.mxu0 0.0
        %2310 = vmatprep.subr.mxu0 0.0
        %2311 = vmatpush1.msra.mxu0 0.0
        %2312 = vmatprep.subr.mxu0 0.0
        %2313 = vmatpush1.msra.mxu0 0.0
        %2314 = vmatprep.subr.mxu0 0.0
        %2315 = vmatpush1.msra.mxu0 0.0
        %2316 = vmatprep.subr.mxu0 0.0
        %2317 = vmatpush1.msra.mxu0 0.0
        %2318 = vmatprep.subr.mxu0 0.0
        %2319 = vmatpush1.msra.mxu0 0.0
        %2320 = vmatprep.subr.mxu0 0.0
        %2321 = vmatpush1.msra.mxu0 0.0
        %2322 = vmatprep.subr.mxu0 0.0
        %2323 = vmatpush1.msra.mxu0 0.0
        %2324 = vmatprep.subr.mxu0 0.0
        %2325 = vmatpush1.msra.mxu0 0.0
        %2326 = vmatprep.subr.mxu0 0.0
        %2327 = vmatpush1.msra.mxu0 0.0
        %2328 = vmatprep.subr.mxu0 0.0
        %2329 = vmatpush1.msra.mxu0 0.0
        %2330 = vmatprep.subr.mxu0 0.0
        %2331 = vmatpush1.msra.mxu0 0.0
        %2332 = vmatprep.subr.mxu0 0.0
        %2333 = vmatpush1.msra.mxu0 0.0
        %2334 = vmatprep.subr.mxu0 0.0
        %2335 = vmatpush1.msra.mxu0 0.0
        %2336 = vmatprep.subr.mxu0 0.0
        %2337 = vmatpush1.msra.mxu0 0.0
        %2338 = vmatprep.subr.mxu0 0.0
        %2339 = vmatpush1.msra.mxu0 0.0
        %2340 = vmatprep.subr.mxu0 0.0
        %2341 = vmatpush1.msra.mxu0 0.0
        %2342 = vmatprep.subr.mxu0 0.0
        %2343 = vmatpush1.msra.mxu0 0.0
        %2344 = vmatprep.subr.mxu0 0.0
        %2345 = vmatpush1.msra.mxu0 0.0
        %2346 = vmatprep.subr.mxu0 0.0
        %2347 = vmatpush1.msra.mxu0 0.0
        %2348 = vmatprep.subr.mxu0 0.0
        %2349 = vmatpush1.msra.mxu0 0.0
        %2350 = vmatprep.subr.mxu0 0.0
        %2351 = vmatpush1.msra.mxu0 0.0
        %2352 = vmatprep.subr.mxu0 0.0
        %2353 = vmatpush1.msra.mxu0 0.0
        %2354 = vmatprep.subr.mxu0 0.0
        %2355 = vmatpush1.msra.mxu0 0.0
        %2356 = vmatprep.subr.mxu0 0.0
        %2357 = vmatpush1.msra.mxu0 0.0
        %2358 = vmatprep.subr.mxu0 0.0
        %2359 = vmatpush1.msra.mxu0 0.0
        %2360 = vmatprep.subr.mxu0 0.0
        %2361 = vmatpush1.msra.mxu0 0.0
        %2362 = vmatprep.mubr.f32.mxu0 0.0
        %2363 = vmatmul.mubr.f32.gmra.mrb[0].mxu0 %v2291
        %v2364 = vpop.f32.mrb[0].mxu0
        %v2365 = vadd.f32 0.0, %v2364
        %v2366 = vpop.f32.mrb[0].mxu0
        %2367 = vmatprep.mubr.f32.mxu0 0.0
        %2368 = vmatmul.mubr.f32.gmra.mrb[0].mxu0 %v2294
        %v2369 = vpop.f32.mrb[0].mxu0
        %v2370 = vadd.f32 0.0, %v2369
        %v2371 = vpop.f32.mrb[0].mxu0
        %2372 = vdwg.mxu0
        %v2373 = vadd.f32 %v2264, %v2365
        %v2374 = vadd.f32 %v2265, %v2370
        %v2375 = vxor.u32 %v2374, 2147483648
        %v2376 = vmul.f32 %v2375, 1.442695
        %v2377 = vpow.pop %v2376
        %v2378 = vadd.f32 %v2377, 1.0
        %v2379 = vrcp.pop %v2378
        %v2380 = vmul.f32 1.0, %v2379
        %v2381 = vmul.f32 %v2373, %v2380
        %v2384 = vunpack.c.l.s4 1966171168
        %v2385 = vunpack.c.0.s8 %v2384
        %v2386 = vlaneseq
        %v2387 = vshrl.u32 %v2386, 7
        %v2388 = vsub.s32 %v2385, %v2387
        %v2389 = vrot.slane %v2381, %v2388
        %v2390 = vcombine.high %v2389, %v2389
        %v2392 = vunpack.c.l.s4 1966171168
        %v2393 = vunpack.c.0.s8 %v2392
        %v2394 = vlaneseq
        %v2395 = vshrl.u32 %v2394, 7
        %v2396 = vsub.s32 %v2393, %v2395
        %v2397 = vrot.slane %v2389, %v2396
        %v2399 = vunpack.c.l.s4 1966171168
        %v2400 = vunpack.c.0.s8 %v2399
        %v2401 = vlaneseq
        %v2402 = vshrl.u32 %v2401, 7
        %v2403 = vsub.s32 %v2400, %v2402
        %v2404 = vrot.slane %v2390, %v2403
        %v2405 = vcombine.high %v2397, %v2397
        %v2406 = vcombine.high %v2404, %v2404
        %2411 = vst.msk [vmem:[%s190 + $0x5] sm:$0x1] %vm575, %v2397
        %2412 = vst.msk [vmem:[%s190 + $0xd] sm:$0x1] %vm575, %v2404
        %2413 = vst.msk [vmem:[%s190 + $0x15] sm:$0x1] %vm575, %v2405
        %2414 = vst.msk [vmem:[%s190 + $0x1d] sm:$0x1] %vm575, %v2406
        %p2415 = scmp.lt.s32.totalorder %s17, 1
        %s2416 = scalar_select %p2415, %s17, 1
        %s2417 = smul.addr %s2416, 4
        %s2418 = smul.addr %s2417, 8
        %s2419 = scalar_lea.vmem %s3, %s2418
        // Predicated region
        $region37: #{tpu_custom_call.1} parent=31 // pred_check
          %p2420 = pneg %p103
        $region38: #{tpu_custom_call.1} parent=31 // pred_check_branch
          %2422 = sbr.rel (%p2420) target = $region40
        $region39: #{tpu_custom_call.1} parent=31 // pred_region
          _
        $region40: #{tpu_custom_call.1} parent=31 // pred_fallthru
          _
      $region32: #{tpu_custom_call.1} parent=5 // pred_fallthru
        _
      %p2423 = scmp.le.s32.totalorder 2, %s12
      // Predicated region
      $region41: #{tpu_custom_call.1} parent=5 // pred_check
        %p2424 = pneg %p2423
      $region42: #{tpu_custom_call.1} parent=5 // pred_check_branch
        %2426 = sbr.rel (%p2424) target = $region44
      $region43: #{tpu_custom_call.1} parent=5 // pred_region
        %s2427 = ssub.s32 %s12, 2
        // Predicated region
        $region45: #{tpu_custom_call.1} parent=43 // pred_check
          %p2428 = pneg %p109
        $region46: #{tpu_custom_call.1} parent=43 // pred_check_branch
          %2430 = sbr.rel (%p2428) target = $region48
        $region47: #{tpu_custom_call.1} parent=43 // pred_region
          %p2431 = scmp.lt.s32.totalorder %s18, 1
          %s2432 = scalar_select %p2431, %s18, 1
          %s2433 = smul.addr %s2432, 4
          %s2434 = smul.addr %s2433, 8
          %s2435 = scalar_lea.vmem %s3, %s2434
        $region48: #{tpu_custom_call.1} parent=43 // pred_fallthru
          _
      $region44: #{tpu_custom_call.1} parent=5 // pred_fallthru
        _
    $region6: #{tpu_custom_call.1} parent=1 // loop_footer
      %s16 = sadd.s32 1, %s12
    $region7: #{tpu_custom_call.1} parent=1 // loop_footer_branch
      %11 = sbr.rel target = $region3
    $region8: #{tpu_custom_call.1} parent=1 // loop_exit
      _
    %2436 = vsyncpa [#allocation3], 1
    %s2437 = scalar_lea.sflag [#allocation3], 1
    %2438 = vsyncpa %s2437, 1

</llo_original>
